<compile_context>
chip_gen: v5e
topology: v5e:2x2
jax: 0.10.0
libtpu: 0.0.40
codegen_flags: <defaults>
</compile_context>

<pallas_src>
import functools

import jax
import jax.numpy as jnp
import numpy as np
from jax import lax
from jax.experimental import pallas as pl
from jax.experimental.pallas import tpu as pltpu

LANE = 128


def _round_up(x, m):
    return (x + m - 1) // m * m


# ----------------------------- math helpers (kernel-safe) --------------------

def _sigmoid(x):
    # single-exp stable logistic
    e = jnp.exp(-jnp.abs(x))
    return jnp.where(x >= 0.0, 1.0 / (1.0 + e), e / (1.0 + e))


def _silu(x):
    return x * _sigmoid(x)


def _softplus(x):
    # stable softplus (PyTorch default beta=1, threshold=20)
    return jnp.where(x > 20.0, x, jnp.log1p(jnp.exp(jnp.minimum(x, 20.0))))


# ----------------------------- Pallas kernel ---------------------------------

def _vae_kernel(x_ref, noise_ref,
                ew0, eb0, ew1, eb1, ew2, eb2, ew3, eb3,
                wmu, bmu, wlv, blv,
                dw0, db0, dw1, db1, dw2, db2, dw3, db3, dw4, db4,
                mu_ref, scale_ref, z_ref, recon_ref, losses_ref,
                *, batch, batch_tile, input_dim, latent_dim):
    x = x_ref[...]

    def lin(h, w_ref, b_ref):
        return jnp.dot(h, w_ref[...], preferred_element_type=jnp.float32) + b_ref[...]

    # ---- encoder trunk ----
    h = _silu(lin(x, ew0, eb0))
    h = _silu(lin(h, ew1, eb1))
    h = _silu(lin(h, ew2, eb2))
    h = _silu(lin(h, ew3, eb3))

    # ---- split heads (no lane slicing of a fused (B, 2*latent) tile) ----
    mu = lin(h, wmu, bmu)
    logvar = lin(h, wlv, blv)
    scale = _softplus(logvar) + 1e-8

    # ---- reparameterize: z = mu + scale * eps ----
    z = mu + scale * noise_ref[...]

    # ---- decoder ----
    h = _silu(lin(z, dw0, db0))
    h = _silu(lin(h, dw1, db1))
    h = _silu(lin(h, dw2, db2))
    h = _silu(lin(h, dw3, db3))
    u = lin(h, dw4, db4)                    # logits
    recon = _sigmoid(u)

    mu_ref[...] = mu
    scale_ref[...] = scale
    z_ref[...] = z
    recon_ref[...] = recon

    # ---- validity masks (padded rows / lanes contribute 0 to the losses) ----
    row0 = pl.program_id(0) * batch_tile
    rows = row0 + lax.broadcasted_iota(jnp.int32, (batch_tile, 1), 0)
    row_valid = (rows < batch).astype(jnp.float32)                       # (bt, 1)

    lat_cols = lax.broadcasted_iota(jnp.int32, (1, mu.shape[-1]), 1)
    lat_valid = (lat_cols < latent_dim).astype(jnp.float32)              # (1, Lpad)
    in_cols = lax.broadcasted_iota(jnp.int32, (1, u.shape[-1]), 1)
    in_valid = (in_cols < input_dim).astype(jnp.float32)                 # (1, Dpad)

    # ---- KL(N(mu, diag(scale^2)) || N(0, I)), partial sum over this tile ----
    kl_elem = 0.5 * (scale * scale + mu * mu - 1.0 - 2.0 * jnp.log(scale))
    kl_part = jnp.sum(kl_elem * (row_valid * lat_valid))

    # ---- BCE(sigmoid(u), x + 0.5) from logits (clamp -100 matches BCELoss) ----
    t = x + 0.5
    log_p = jnp.maximum(-_softplus(-u), -100.0)
    log_1mp = jnp.maximum(-_softplus(u), -100.0)
    bce = -(t * log_p + (1.0 - t) * log_1mp)
    recon_part = jnp.sum(bce * (row_valid * in_valid))

    # pack the two partial sums into one lane-dense (1, 8, 128) output block
    r = lax.broadcasted_iota(jnp.int32, (8, 128), 0)
    c = lax.broadcasted_iota(jnp.int32, (8, 128), 1)
    part = jnp.where((r == 0) & (c == 0), recon_part,
                     jnp.where((r == 0) & (c == 1), kl_part, 0.0))
    losses_ref[...] = part[None]


# ----------------------------- wrapper ----------------------------------------

def vae_forward(x, noise, enc_params, dec_params, *, batch_tile=None):
    """Runs the fused VAE forward kernel.

    x:      (B, input_dim) float32
    noise:  (B, latent_dim) float32 standard-normal draws (reparameterization)
    enc_params / dec_params: lists of (W[in,out], b[out]) float32 pairs.
    Returns (mu, scale, z, recon_x, loss, loss_recon, loss_kl).
    """
    B, input_dim = x.shape
    latent_dim = noise.shape[-1]

    d_pad = _round_up(input_dim, LANE)
    l_pad = _round_up(latent_dim, LANE)

    if batch_tile is None:
        batch_tile = 256 if B >= 256 else _round_up(B, 8)
    b_pad = _round_up(B, batch_tile)
    n_tiles = b_pad // batch_tile

    def pad_w(w):
        fi, fo = w.shape
        return jnp.pad(w, ((0, _round_up(fi, LANE) - fi),
                           (0, _round_up(fo, LANE) - fo)))

    def pad_b(b):
        fo = b.shape[0]
        return jnp.pad(b, (0, _round_up(fo, LANE) - fo)).reshape(1, -1)

    # split the final encoder layer into mu / logvar heads
    w_head, b_head = enc_params[-1]
    w_mu, w_lv = w_head[:, :latent_dim], w_head[:, latent_dim:]
    b_mu, b_lv = b_head[:latent_dim], b_head[latent_dim:]

    flat = []
    for w, b in enc_params[:-1]:
        flat += [pad_w(w), pad_b(b)]
    flat += [pad_w(w_mu), pad_b(b_mu), pad_w(w_lv), pad_b(b_lv)]
    for w, b in dec_params:
        flat += [pad_w(w), pad_b(b)]

    x_p = jnp.pad(x, ((0, b_pad - B), (0, d_pad - input_dim)))
    noise_p = jnp.pad(noise, ((0, b_pad - B), (0, l_pad - latent_dim)))

    x_spec = pl.BlockSpec((batch_tile, d_pad), lambda i: (i, 0))
    noise_spec = pl.BlockSpec((batch_tile, l_pad), lambda i: (i, 0))
    # weights / biases: full-array blocks with constant index_map -> stay
    # resident in VMEM across all batch tiles.
    w_specs = [pl.BlockSpec(a.shape, lambda i: (0, 0)) for a in flat]

    out_shape = (
        jax.ShapeDtypeStruct((b_pad, l_pad), jnp.float32),      # mu
        jax.ShapeDtypeStruct((b_pad, l_pad), jnp.float32),      # scale
        jax.ShapeDtypeStruct((b_pad, l_pad), jnp.float32),      # z
        jax.ShapeDtypeStruct((b_pad, d_pad), jnp.float32),      # recon_x
        jax.ShapeDtypeStruct((n_tiles, 8, 128), jnp.float32),   # loss partial sums
    )
    out_specs = (
        pl.BlockSpec((batch_tile, l_pad), lambda i: (i, 0)),
        pl.BlockSpec((batch_tile, l_pad), lambda i: (i, 0)),
        pl.BlockSpec((batch_tile, l_pad), lambda i: (i, 0)),
        pl.BlockSpec((batch_tile, d_pad), lambda i: (i, 0)),
        pl.BlockSpec((1, 8, 128), lambda i: (i, 0, 0)),
    )

    kernel = functools.partial(_vae_kernel, batch=B, batch_tile=batch_tile,
                               input_dim=input_dim, latent_dim=latent_dim)

    mu_p, scale_p, z_p, recon_p, parts = pl.pallas_call(
        kernel,
        out_shape=out_shape,
        grid=(n_tiles,),
        in_specs=[x_spec, noise_spec] + w_specs,
        out_specs=out_specs,
        compiler_params=pltpu.CompilerParams(
            dimension_semantics=("parallel",)),
    )(x_p, noise_p, *flat)

    mu = mu_p[:B, :latent_dim]
    scale = scale_p[:B, :latent_dim]
    z = z_p[:B, :latent_dim]
    recon = recon_p[:B, :input_dim]

    totals = jnp.sum(parts, axis=(0, 1))
    loss_recon = totals[0] / B
    loss_kl = totals[1] / B
    loss = loss_recon + loss_kl
    return mu, scale, z, recon, loss, loss_recon, loss_kl


# ----------------------------- pure-JAX reference ------------------------------

def vae_reference(x, noise, enc_params, dec_params):
    def lin(h, w, b):
        return h @ w + b

    h = x
    for w, b in enc_params[:-1]:
        h = jax.nn.silu(lin(h, w, b))
    enc = lin(h, *enc_params[-1])
    latent = noise.shape[-1]
    mu, logvar = enc[:, :latent], enc[:, latent:]
    scale = jax.nn.softplus(logvar) + 1e-8
    z = mu + scale * noise

    h = z
    for w, b in dec_params[:-1]:
        h = jax.nn.silu(lin(h, w, b))
    recon = jax.nn.sigmoid(lin(h, *dec_params[-1]))

    loss_kl = jnp.mean(0.5 * jnp.sum(scale**2 + mu**2 - 1.0 - 2.0 * jnp.log(scale), axis=-1))
    t = x + 0.5
    bce = -(t * jnp.maximum(jnp.log(recon), -100.0)
            + (1.0 - t) * jnp.maximum(jnp.log1p(-recon), -100.0))
    loss_recon = jnp.mean(jnp.sum(bce, axis=-1))
    return mu, scale, z, recon, loss_recon + loss_kl, loss_recon, loss_kl


# ----------------------------- parameter init ----------------------------------

def init_linear(key, fan_in, fan_out):
    """PyTorch-style uniform init, weight stored as (in, out)."""
    kw, kb = jax.random.split(key)
    bound = 1.0 / np.sqrt(fan_in)
    w = jax.random.uniform(kw, (fan_in, fan_out), jnp.float32, -bound, bound)
    b = jax.random.uniform(kb, (fan_out,), jnp.float32, -bound, bound)
    return w, b


if __name__ == "__main__":
    # small shapes consistent with the module's forward
    batch = 8
    input_dim = 64
    hidden_dim = 64
    latent_dim = 8

    enc_dims = [(input_dim, hidden_dim),
                (hidden_dim, hidden_dim // 2),
                (hidden_dim // 2, hidden_dim // 4),
                (hidden_dim // 4, hidden_dim // 8),
                (hidden_dim // 8, 2 * latent_dim)]
    dec_dims = [(latent_dim, hidden_dim // 8),
                (hidden_dim // 8, hidden_dim // 4),
                (hidden_dim // 4, hidden_dim // 2),
                (hidden_dim // 2, hidden_dim),
                (hidden_dim, input_dim)]

    root = jax.random.PRNGKey(0)
    keys = jax.random.split(root, len(enc_dims) + len(dec_dims) + 2)

    enc_params = [init_linear(keys[i], fi, fo) for i, (fi, fo) in enumerate(enc_dims)]
    dec_params = [init_linear(keys[len(enc_dims) + i], fi, fo)
                  for i, (fi, fo) in enumerate(dec_dims)]

    # x in [-0.5, 0.5] so that x + 0.5 is a valid BCE target in [0, 1]
    x = jax.random.uniform(keys[-2], (batch, input_dim), jnp.float32, -0.5, 0.5)
    # standard-normal noise for the reparameterization trick (rsample)
    noise = jax.random.normal(keys[-1], (batch, latent_dim), jnp.float32)

    outs = vae_forward(x, noise, enc_params, dec_params)
    outs = jax.block_until_ready(outs)
    refs = vae_reference(x, noise, enc_params, dec_params)

    for got, ref in zip(outs, refs):
        np.testing.assert_allclose(np.asarray(got), np.asarray(ref),
                                   rtol=1e-4, atol=1e-5)

    print("KERNEL_OK")
</pallas_src>

<mosaic_0001>
module attributes {stable_mosaic.version = 11 : i64} {
  func.func @_vae_kernel(%arg0: i32, %arg1: memref<8x128xf32, #tpu.memory_space<vmem>>, %arg2: memref<8x128xf32, #tpu.memory_space<vmem>>, %arg3: memref<128x128xf32, #tpu.memory_space<vmem>>, %arg4: memref<1x128xf32, #tpu.memory_space<vmem>>, %arg5: memref<128x128xf32, #tpu.memory_space<vmem>>, %arg6: memref<1x128xf32, #tpu.memory_space<vmem>>, %arg7: memref<128x128xf32, #tpu.memory_space<vmem>>, %arg8: memref<1x128xf32, #tpu.memory_space<vmem>>, %arg9: memref<128x128xf32, #tpu.memory_space<vmem>>, %arg10: memref<1x128xf32, #tpu.memory_space<vmem>>, %arg11: memref<128x128xf32, #tpu.memory_space<vmem>>, %arg12: memref<1x128xf32, #tpu.memory_space<vmem>>, %arg13: memref<128x128xf32, #tpu.memory_space<vmem>>, %arg14: memref<1x128xf32, #tpu.memory_space<vmem>>, %arg15: memref<128x128xf32, #tpu.memory_space<vmem>>, %arg16: memref<1x128xf32, #tpu.memory_space<vmem>>, %arg17: memref<128x128xf32, #tpu.memory_space<vmem>>, %arg18: memref<1x128xf32, #tpu.memory_space<vmem>>, %arg19: memref<128x128xf32, #tpu.memory_space<vmem>>, %arg20: memref<1x128xf32, #tpu.memory_space<vmem>>, %arg21: memref<128x128xf32, #tpu.memory_space<vmem>>, %arg22: memref<1x128xf32, #tpu.memory_space<vmem>>, %arg23: memref<128x128xf32, #tpu.memory_space<vmem>>, %arg24: memref<1x128xf32, #tpu.memory_space<vmem>>, %arg25: memref<8x128xf32, #tpu.memory_space<vmem>>, %arg26: memref<8x128xf32, #tpu.memory_space<vmem>>, %arg27: memref<8x128xf32, #tpu.memory_space<vmem>>, %arg28: memref<8x128xf32, #tpu.memory_space<vmem>>, %arg29: memref<1x8x128xf32, #tpu.memory_space<vmem>>) attributes {dimension_semantics = [#tpu.dimension_semantics<parallel>], iteration_bounds = array<i64: 1>, scalar_prefetch = 0 : i64, scratch_operands = 0 : i64, tpu.core_type = #tpu.core_type<tc>, window_params = [{transform_indices = @transform_0, window_bounds = array<i64: 8, 128>}, {transform_indices = @transform_1, window_bounds = array<i64: 8, 128>}, {pipeline_mode = #tpu.pipeline_mode<synchronous>, transform_indices = @transform_2, window_bounds = array<i64: 128, 128>}, {pipeline_mode = #tpu.pipeline_mode<synchronous>, transform_indices = @transform_3, window_bounds = array<i64: 1, 128>}, {pipeline_mode = #tpu.pipeline_mode<synchronous>, transform_indices = @transform_4, window_bounds = array<i64: 128, 128>}, {pipeline_mode = #tpu.pipeline_mode<synchronous>, transform_indices = @transform_5, window_bounds = array<i64: 1, 128>}, {pipeline_mode = #tpu.pipeline_mode<synchronous>, transform_indices = @transform_6, window_bounds = array<i64: 128, 128>}, {pipeline_mode = #tpu.pipeline_mode<synchronous>, transform_indices = @transform_7, window_bounds = array<i64: 1, 128>}, {pipeline_mode = #tpu.pipeline_mode<synchronous>, transform_indices = @transform_8, window_bounds = array<i64: 128, 128>}, {pipeline_mode = #tpu.pipeline_mode<synchronous>, transform_indices = @transform_9, window_bounds = array<i64: 1, 128>}, {pipeline_mode = #tpu.pipeline_mode<synchronous>, transform_indices = @transform_10, window_bounds = array<i64: 128, 128>}, {pipeline_mode = #tpu.pipeline_mode<synchronous>, transform_indices = @transform_11, window_bounds = array<i64: 1, 128>}, {pipeline_mode = #tpu.pipeline_mode<synchronous>, transform_indices = @transform_12, window_bounds = array<i64: 128, 128>}, {pipeline_mode = #tpu.pipeline_mode<synchronous>, transform_indices = @transform_13, window_bounds = array<i64: 1, 128>}, {pipeline_mode = #tpu.pipeline_mode<synchronous>, transform_indices = @transform_14, window_bounds = array<i64: 128, 128>}, {pipeline_mode = #tpu.pipeline_mode<synchronous>, transform_indices = @transform_15, window_bounds = array<i64: 1, 128>}, {pipeline_mode = #tpu.pipeline_mode<synchronous>, transform_indices = @transform_16, window_bounds = array<i64: 128, 128>}, {pipeline_mode = #tpu.pipeline_mode<synchronous>, transform_indices = @transform_17, window_bounds = array<i64: 1, 128>}, {pipeline_mode = #tpu.pipeline_mode<synchronous>, transform_indices = @transform_18, window_bounds = array<i64: 128, 128>}, {pipeline_mode = #tpu.pipeline_mode<synchronous>, transform_indices = @transform_19, window_bounds = array<i64: 1, 128>}, {pipeline_mode = #tpu.pipeline_mode<synchronous>, transform_indices = @transform_20, window_bounds = array<i64: 128, 128>}, {pipeline_mode = #tpu.pipeline_mode<synchronous>, transform_indices = @transform_21, window_bounds = array<i64: 1, 128>}, {pipeline_mode = #tpu.pipeline_mode<synchronous>, transform_indices = @transform_22, window_bounds = array<i64: 128, 128>}, {pipeline_mode = #tpu.pipeline_mode<synchronous>, transform_indices = @transform_23, window_bounds = array<i64: 1, 128>}, {transform_indices = @transform_24, window_bounds = array<i64: 8, 128>}, {transform_indices = @transform_25, window_bounds = array<i64: 8, 128>}, {transform_indices = @transform_26, window_bounds = array<i64: 8, 128>}, {transform_indices = @transform_27, window_bounds = array<i64: 8, 128>}, {transform_indices = @transform_28, window_bounds = array<i64: 1, 8, 128>}]} {
    %c0 = arith.constant 0 : index
    %c0_0 = arith.constant 0 : index
    %0 = vector.load %arg1[%c0, %c0_0] : memref<8x128xf32, #tpu.memory_space<vmem>>, vector<8x128xf32>
    %c0_1 = arith.constant 0 : index
    %c0_2 = arith.constant 0 : index
    %1 = vector.load %arg3[%c0_1, %c0_2] : memref<128x128xf32, #tpu.memory_space<vmem>>, vector<128x128xf32>
    %cst = arith.constant dense<0.000000e+00> : vector<8x128xf32>
    %2 = tpu.matmul %0, %1, %cst {dimension_numbers = #tpu.dot_dimension_numbers<[1], [0], [0], [1], [0, 0, 1, 1], [], []>} : vector<8x128xf32>, vector<128x128xf32>, vector<8x128xf32> -> vector<8x128xf32>
    %c0_3 = arith.constant 0 : index
    %c0_4 = arith.constant 0 : index
    %3 = vector.load %arg4[%c0_3, %c0_4] : memref<1x128xf32, #tpu.memory_space<vmem>>, vector<1x128xf32>
    %4 = vector.broadcast %3 : vector<1x128xf32> to vector<8x128xf32>
    %5 = arith.addf %2, %4 : vector<8x128xf32>
    %6 = math.absf %5 : vector<8x128xf32>
    %cst_5 = arith.constant 0.000000e+00 : f32
    %7 = vector.broadcast %cst_5 : f32 to vector<8x128xf32>
    %8 = arith.subf %7, %6 : vector<8x128xf32>
    %9 = math.exp %8 : vector<8x128xf32>
    %cst_6 = arith.constant 0.000000e+00 : f32
    %10 = vector.broadcast %cst_6 : f32 to vector<8x128xf32>
    %11 = arith.cmpf oge, %5, %10 : vector<8x128xf32>
    %cst_7 = arith.constant 1.000000e+00 : f32
    %12 = vector.broadcast %cst_7 : f32 to vector<8x128xf32>
    %13 = arith.addf %12, %9 : vector<8x128xf32>
    %cst_8 = arith.constant 1.000000e+00 : f32
    %14 = vector.broadcast %cst_8 : f32 to vector<8x128xf32>
    %15 = arith.divf %14, %13 : vector<8x128xf32>
    %cst_9 = arith.constant 1.000000e+00 : f32
    %16 = vector.broadcast %cst_9 : f32 to vector<8x128xf32>
    %17 = arith.addf %16, %9 : vector<8x128xf32>
    %18 = arith.divf %9, %17 : vector<8x128xf32>
    %19 = arith.select %11, %15, %18 : vector<8x128xi1>, vector<8x128xf32>
    %20 = arith.mulf %5, %19 : vector<8x128xf32>
    %c0_10 = arith.constant 0 : index
    %c0_11 = arith.constant 0 : index
    %21 = vector.load %arg5[%c0_10, %c0_11] : memref<128x128xf32, #tpu.memory_space<vmem>>, vector<128x128xf32>
    %cst_12 = arith.constant dense<0.000000e+00> : vector<8x128xf32>
    %22 = tpu.matmul %20, %21, %cst_12 {dimension_numbers = #tpu.dot_dimension_numbers<[1], [0], [0], [1], [0, 0, 1, 1], [], []>} : vector<8x128xf32>, vector<128x128xf32>, vector<8x128xf32> -> vector<8x128xf32>
    %c0_13 = arith.constant 0 : index
    %c0_14 = arith.constant 0 : index
    %23 = vector.load %arg6[%c0_13, %c0_14] : memref<1x128xf32, #tpu.memory_space<vmem>>, vector<1x128xf32>
    %24 = vector.broadcast %23 : vector<1x128xf32> to vector<8x128xf32>
    %25 = arith.addf %22, %24 : vector<8x128xf32>
    %26 = math.absf %25 : vector<8x128xf32>
    %cst_15 = arith.constant 0.000000e+00 : f32
    %27 = vector.broadcast %cst_15 : f32 to vector<8x128xf32>
    %28 = arith.subf %27, %26 : vector<8x128xf32>
    %29 = math.exp %28 : vector<8x128xf32>
    %cst_16 = arith.constant 0.000000e+00 : f32
    %30 = vector.broadcast %cst_16 : f32 to vector<8x128xf32>
    %31 = arith.cmpf oge, %25, %30 : vector<8x128xf32>
    %cst_17 = arith.constant 1.000000e+00 : f32
    %32 = vector.broadcast %cst_17 : f32 to vector<8x128xf32>
    %33 = arith.addf %32, %29 : vector<8x128xf32>
    %cst_18 = arith.constant 1.000000e+00 : f32
    %34 = vector.broadcast %cst_18 : f32 to vector<8x128xf32>
    %35 = arith.divf %34, %33 : vector<8x128xf32>
    %cst_19 = arith.constant 1.000000e+00 : f32
    %36 = vector.broadcast %cst_19 : f32 to vector<8x128xf32>
    %37 = arith.addf %36, %29 : vector<8x128xf32>
    %38 = arith.divf %29, %37 : vector<8x128xf32>
    %39 = arith.select %31, %35, %38 : vector<8x128xi1>, vector<8x128xf32>
    %40 = arith.mulf %25, %39 : vector<8x128xf32>
    %c0_20 = arith.constant 0 : index
    %c0_21 = arith.constant 0 : index
    %41 = vector.load %arg7[%c0_20, %c0_21] : memref<128x128xf32, #tpu.memory_space<vmem>>, vector<128x128xf32>
    %cst_22 = arith.constant dense<0.000000e+00> : vector<8x128xf32>
    %42 = tpu.matmul %40, %41, %cst_22 {dimension_numbers = #tpu.dot_dimension_numbers<[1], [0], [0], [1], [0, 0, 1, 1], [], []>} : vector<8x128xf32>, vector<128x128xf32>, vector<8x128xf32> -> vector<8x128xf32>
    %c0_23 = arith.constant 0 : index
    %c0_24 = arith.constant 0 : index
    %43 = vector.load %arg8[%c0_23, %c0_24] : memref<1x128xf32, #tpu.memory_space<vmem>>, vector<1x128xf32>
    %44 = vector.broadcast %43 : vector<1x128xf32> to vector<8x128xf32>
    %45 = arith.addf %42, %44 : vector<8x128xf32>
    %46 = math.absf %45 : vector<8x128xf32>
    %cst_25 = arith.constant 0.000000e+00 : f32
    %47 = vector.broadcast %cst_25 : f32 to vector<8x128xf32>
    %48 = arith.subf %47, %46 : vector<8x128xf32>
    %49 = math.exp %48 : vector<8x128xf32>
    %cst_26 = arith.constant 0.000000e+00 : f32
    %50 = vector.broadcast %cst_26 : f32 to vector<8x128xf32>
    %51 = arith.cmpf oge, %45, %50 : vector<8x128xf32>
    %cst_27 = arith.constant 1.000000e+00 : f32
    %52 = vector.broadcast %cst_27 : f32 to vector<8x128xf32>
    %53 = arith.addf %52, %49 : vector<8x128xf32>
    %cst_28 = arith.constant 1.000000e+00 : f32
    %54 = vector.broadcast %cst_28 : f32 to vector<8x128xf32>
    %55 = arith.divf %54, %53 : vector<8x128xf32>
    %cst_29 = arith.constant 1.000000e+00 : f32
    %56 = vector.broadcast %cst_29 : f32 to vector<8x128xf32>
    %57 = arith.addf %56, %49 : vector<8x128xf32>
    %58 = arith.divf %49, %57 : vector<8x128xf32>
    %59 = arith.select %51, %55, %58 : vector<8x128xi1>, vector<8x128xf32>
    %60 = arith.mulf %45, %59 : vector<8x128xf32>
    %c0_30 = arith.constant 0 : index
    %c0_31 = arith.constant 0 : index
    %61 = vector.load %arg9[%c0_30, %c0_31] : memref<128x128xf32, #tpu.memory_space<vmem>>, vector<128x128xf32>
    %cst_32 = arith.constant dense<0.000000e+00> : vector<8x128xf32>
    %62 = tpu.matmul %60, %61, %cst_32 {dimension_numbers = #tpu.dot_dimension_numbers<[1], [0], [0], [1], [0, 0, 1, 1], [], []>} : vector<8x128xf32>, vector<128x128xf32>, vector<8x128xf32> -> vector<8x128xf32>
    %c0_33 = arith.constant 0 : index
    %c0_34 = arith.constant 0 : index
    %63 = vector.load %arg10[%c0_33, %c0_34] : memref<1x128xf32, #tpu.memory_space<vmem>>, vector<1x128xf32>
    %64 = vector.broadcast %63 : vector<1x128xf32> to vector<8x128xf32>
    %65 = arith.addf %62, %64 : vector<8x128xf32>
    %66 = math.absf %65 : vector<8x128xf32>
    %cst_35 = arith.constant 0.000000e+00 : f32
    %67 = vector.broadcast %cst_35 : f32 to vector<8x128xf32>
    %68 = arith.subf %67, %66 : vector<8x128xf32>
    %69 = math.exp %68 : vector<8x128xf32>
    %cst_36 = arith.constant 0.000000e+00 : f32
    %70 = vector.broadcast %cst_36 : f32 to vector<8x128xf32>
    %71 = arith.cmpf oge, %65, %70 : vector<8x128xf32>
    %cst_37 = arith.constant 1.000000e+00 : f32
    %72 = vector.broadcast %cst_37 : f32 to vector<8x128xf32>
    %73 = arith.addf %72, %69 : vector<8x128xf32>
    %cst_38 = arith.constant 1.000000e+00 : f32
    %74 = vector.broadcast %cst_38 : f32 to vector<8x128xf32>
    %75 = arith.divf %74, %73 : vector<8x128xf32>
    %cst_39 = arith.constant 1.000000e+00 : f32
    %76 = vector.broadcast %cst_39 : f32 to vector<8x128xf32>
    %77 = arith.addf %76, %69 : vector<8x128xf32>
    %78 = arith.divf %69, %77 : vector<8x128xf32>
    %79 = arith.select %71, %75, %78 : vector<8x128xi1>, vector<8x128xf32>
    %80 = arith.mulf %65, %79 : vector<8x128xf32>
    %c0_40 = arith.constant 0 : index
    %c0_41 = arith.constant 0 : index
    %81 = vector.load %arg11[%c0_40, %c0_41] : memref<128x128xf32, #tpu.memory_space<vmem>>, vector<128x128xf32>
    %cst_42 = arith.constant dense<0.000000e+00> : vector<8x128xf32>
    %82 = tpu.matmul %80, %81, %cst_42 {dimension_numbers = #tpu.dot_dimension_numbers<[1], [0], [0], [1], [0, 0, 1, 1], [], []>} : vector<8x128xf32>, vector<128x128xf32>, vector<8x128xf32> -> vector<8x128xf32>
    %c0_43 = arith.constant 0 : index
    %c0_44 = arith.constant 0 : index
    %83 = vector.load %arg12[%c0_43, %c0_44] : memref<1x128xf32, #tpu.memory_space<vmem>>, vector<1x128xf32>
    %84 = vector.broadcast %83 : vector<1x128xf32> to vector<8x128xf32>
    %85 = arith.addf %82, %84 : vector<8x128xf32>
    %c0_45 = arith.constant 0 : index
    %c0_46 = arith.constant 0 : index
    %86 = vector.load %arg13[%c0_45, %c0_46] : memref<128x128xf32, #tpu.memory_space<vmem>>, vector<128x128xf32>
    %cst_47 = arith.constant dense<0.000000e+00> : vector<8x128xf32>
    %87 = tpu.matmul %80, %86, %cst_47 {dimension_numbers = #tpu.dot_dimension_numbers<[1], [0], [0], [1], [0, 0, 1, 1], [], []>} : vector<8x128xf32>, vector<128x128xf32>, vector<8x128xf32> -> vector<8x128xf32>
    %c0_48 = arith.constant 0 : index
    %c0_49 = arith.constant 0 : index
    %88 = vector.load %arg14[%c0_48, %c0_49] : memref<1x128xf32, #tpu.memory_space<vmem>>, vector<1x128xf32>
    %89 = vector.broadcast %88 : vector<1x128xf32> to vector<8x128xf32>
    %90 = arith.addf %87, %89 : vector<8x128xf32>
    %cst_50 = arith.constant 2.000000e+01 : f32
    %91 = vector.broadcast %cst_50 : f32 to vector<8x128xf32>
    %92 = arith.cmpf ogt, %90, %91 : vector<8x128xf32>
    %cst_51 = arith.constant 2.000000e+01 : f32
    %93 = vector.broadcast %cst_51 : f32 to vector<8x128xf32>
    %94 = arith.minimumf %90, %93 : vector<8x128xf32>
    %95 = math.exp %94 : vector<8x128xf32>
    %96 = math.log1p %95 : vector<8x128xf32>
    %97 = arith.select %92, %90, %96 : vector<8x128xi1>, vector<8x128xf32>
    %cst_52 = arith.constant 9.99999993E-9 : f32
    %98 = vector.broadcast %cst_52 : f32 to vector<8x128xf32>
    %99 = arith.addf %97, %98 : vector<8x128xf32>
    %c0_53 = arith.constant 0 : index
    %c0_54 = arith.constant 0 : index
    %100 = vector.load %arg2[%c0_53, %c0_54] : memref<8x128xf32, #tpu.memory_space<vmem>>, vector<8x128xf32>
    %101 = arith.mulf %99, %100 : vector<8x128xf32>
    %102 = arith.addf %85, %101 : vector<8x128xf32>
    %c0_55 = arith.constant 0 : index
    %c0_56 = arith.constant 0 : index
    %103 = vector.load %arg15[%c0_55, %c0_56] : memref<128x128xf32, #tpu.memory_space<vmem>>, vector<128x128xf32>
    %cst_57 = arith.constant dense<0.000000e+00> : vector<8x128xf32>
    %104 = tpu.matmul %102, %103, %cst_57 {dimension_numbers = #tpu.dot_dimension_numbers<[1], [0], [0], [1], [0, 0, 1, 1], [], []>} : vector<8x128xf32>, vector<128x128xf32>, vector<8x128xf32> -> vector<8x128xf32>
    %c0_58 = arith.constant 0 : index
    %c0_59 = arith.constant 0 : index
    %105 = vector.load %arg16[%c0_58, %c0_59] : memref<1x128xf32, #tpu.memory_space<vmem>>, vector<1x128xf32>
    %106 = vector.broadcast %105 : vector<1x128xf32> to vector<8x128xf32>
    %107 = arith.addf %104, %106 : vector<8x128xf32>
    %108 = math.absf %107 : vector<8x128xf32>
    %cst_60 = arith.constant 0.000000e+00 : f32
    %109 = vector.broadcast %cst_60 : f32 to vector<8x128xf32>
    %110 = arith.subf %109, %108 : vector<8x128xf32>
    %111 = math.exp %110 : vector<8x128xf32>
    %cst_61 = arith.constant 0.000000e+00 : f32
    %112 = vector.broadcast %cst_61 : f32 to vector<8x128xf32>
    %113 = arith.cmpf oge, %107, %112 : vector<8x128xf32>
    %cst_62 = arith.constant 1.000000e+00 : f32
    %114 = vector.broadcast %cst_62 : f32 to vector<8x128xf32>
    %115 = arith.addf %114, %111 : vector<8x128xf32>
    %cst_63 = arith.constant 1.000000e+00 : f32
    %116 = vector.broadcast %cst_63 : f32 to vector<8x128xf32>
    %117 = arith.divf %116, %115 : vector<8x128xf32>
    %cst_64 = arith.constant 1.000000e+00 : f32
    %118 = vector.broadcast %cst_64 : f32 to vector<8x128xf32>
    %119 = arith.addf %118, %111 : vector<8x128xf32>
    %120 = arith.divf %111, %119 : vector<8x128xf32>
    %121 = arith.select %113, %117, %120 : vector<8x128xi1>, vector<8x128xf32>
    %122 = arith.mulf %107, %121 : vector<8x128xf32>
    %c0_65 = arith.constant 0 : index
    %c0_66 = arith.constant 0 : index
    %123 = vector.load %arg17[%c0_65, %c0_66] : memref<128x128xf32, #tpu.memory_space<vmem>>, vector<128x128xf32>
    %cst_67 = arith.constant dense<0.000000e+00> : vector<8x128xf32>
    %124 = tpu.matmul %122, %123, %cst_67 {dimension_numbers = #tpu.dot_dimension_numbers<[1], [0], [0], [1], [0, 0, 1, 1], [], []>} : vector<8x128xf32>, vector<128x128xf32>, vector<8x128xf32> -> vector<8x128xf32>
    %c0_68 = arith.constant 0 : index
    %c0_69 = arith.constant 0 : index
    %125 = vector.load %arg18[%c0_68, %c0_69] : memref<1x128xf32, #tpu.memory_space<vmem>>, vector<1x128xf32>
    %126 = vector.broadcast %125 : vector<1x128xf32> to vector<8x128xf32>
    %127 = arith.addf %124, %126 : vector<8x128xf32>
    %128 = math.absf %127 : vector<8x128xf32>
    %cst_70 = arith.constant 0.000000e+00 : f32
    %129 = vector.broadcast %cst_70 : f32 to vector<8x128xf32>
    %130 = arith.subf %129, %128 : vector<8x128xf32>
    %131 = math.exp %130 : vector<8x128xf32>
    %cst_71 = arith.constant 0.000000e+00 : f32
    %132 = vector.broadcast %cst_71 : f32 to vector<8x128xf32>
    %133 = arith.cmpf oge, %127, %132 : vector<8x128xf32>
    %cst_72 = arith.constant 1.000000e+00 : f32
    %134 = vector.broadcast %cst_72 : f32 to vector<8x128xf32>
    %135 = arith.addf %134, %131 : vector<8x128xf32>
    %cst_73 = arith.constant 1.000000e+00 : f32
    %136 = vector.broadcast %cst_73 : f32 to vector<8x128xf32>
    %137 = arith.divf %136, %135 : vector<8x128xf32>
    %cst_74 = arith.constant 1.000000e+00 : f32
    %138 = vector.broadcast %cst_74 : f32 to vector<8x128xf32>
    %139 = arith.addf %138, %131 : vector<8x128xf32>
    %140 = arith.divf %131, %139 : vector<8x128xf32>
    %141 = arith.select %133, %137, %140 : vector<8x128xi1>, vector<8x128xf32>
    %142 = arith.mulf %127, %141 : vector<8x128xf32>
    %c0_75 = arith.constant 0 : index
    %c0_76 = arith.constant 0 : index
    %143 = vector.load %arg19[%c0_75, %c0_76] : memref<128x128xf32, #tpu.memory_space<vmem>>, vector<128x128xf32>
    %cst_77 = arith.constant dense<0.000000e+00> : vector<8x128xf32>
    %144 = tpu.matmul %142, %143, %cst_77 {dimension_numbers = #tpu.dot_dimension_numbers<[1], [0], [0], [1], [0, 0, 1, 1], [], []>} : vector<8x128xf32>, vector<128x128xf32>, vector<8x128xf32> -> vector<8x128xf32>
    %c0_78 = arith.constant 0 : index
    %c0_79 = arith.constant 0 : index
    %145 = vector.load %arg20[%c0_78, %c0_79] : memref<1x128xf32, #tpu.memory_space<vmem>>, vector<1x128xf32>
    %146 = vector.broadcast %145 : vector<1x128xf32> to vector<8x128xf32>
    %147 = arith.addf %144, %146 : vector<8x128xf32>
    %148 = math.absf %147 : vector<8x128xf32>
    %cst_80 = arith.constant 0.000000e+00 : f32
    %149 = vector.broadcast %cst_80 : f32 to vector<8x128xf32>
    %150 = arith.subf %149, %148 : vector<8x128xf32>
    %151 = math.exp %150 : vector<8x128xf32>
    %cst_81 = arith.constant 0.000000e+00 : f32
    %152 = vector.broadcast %cst_81 : f32 to vector<8x128xf32>
    %153 = arith.cmpf oge, %147, %152 : vector<8x128xf32>
    %cst_82 = arith.constant 1.000000e+00 : f32
    %154 = vector.broadcast %cst_82 : f32 to vector<8x128xf32>
    %155 = arith.addf %154, %151 : vector<8x128xf32>
    %cst_83 = arith.constant 1.000000e+00 : f32
    %156 = vector.broadcast %cst_83 : f32 to vector<8x128xf32>
    %157 = arith.divf %156, %155 : vector<8x128xf32>
    %cst_84 = arith.constant 1.000000e+00 : f32
    %158 = vector.broadcast %cst_84 : f32 to vector<8x128xf32>
    %159 = arith.addf %158, %151 : vector<8x128xf32>
    %160 = arith.divf %151, %159 : vector<8x128xf32>
    %161 = arith.select %153, %157, %160 : vector<8x128xi1>, vector<8x128xf32>
    %162 = arith.mulf %147, %161 : vector<8x128xf32>
    %c0_85 = arith.constant 0 : index
    %c0_86 = arith.constant 0 : index
    %163 = vector.load %arg21[%c0_85, %c0_86] : memref<128x128xf32, #tpu.memory_space<vmem>>, vector<128x128xf32>
    %cst_87 = arith.constant dense<0.000000e+00> : vector<8x128xf32>
    %164 = tpu.matmul %162, %163, %cst_87 {dimension_numbers = #tpu.dot_dimension_numbers<[1], [0], [0], [1], [0, 0, 1, 1], [], []>} : vector<8x128xf32>, vector<128x128xf32>, vector<8x128xf32> -> vector<8x128xf32>
    %c0_88 = arith.constant 0 : index
    %c0_89 = arith.constant 0 : index
    %165 = vector.load %arg22[%c0_88, %c0_89] : memref<1x128xf32, #tpu.memory_space<vmem>>, vector<1x128xf32>
    %166 = vector.broadcast %165 : vector<1x128xf32> to vector<8x128xf32>
    %167 = arith.addf %164, %166 : vector<8x128xf32>
    %168 = math.absf %167 : vector<8x128xf32>
    %cst_90 = arith.constant 0.000000e+00 : f32
    %169 = vector.broadcast %cst_90 : f32 to vector<8x128xf32>
    %170 = arith.subf %169, %168 : vector<8x128xf32>
    %171 = math.exp %170 : vector<8x128xf32>
    %cst_91 = arith.constant 0.000000e+00 : f32
    %172 = vector.broadcast %cst_91 : f32 to vector<8x128xf32>
    %173 = arith.cmpf oge, %167, %172 : vector<8x128xf32>
    %cst_92 = arith.constant 1.000000e+00 : f32
    %174 = vector.broadcast %cst_92 : f32 to vector<8x128xf32>
    %175 = arith.addf %174, %171 : vector<8x128xf32>
    %cst_93 = arith.constant 1.000000e+00 : f32
    %176 = vector.broadcast %cst_93 : f32 to vector<8x128xf32>
    %177 = arith.divf %176, %175 : vector<8x128xf32>
    %cst_94 = arith.constant 1.000000e+00 : f32
    %178 = vector.broadcast %cst_94 : f32 to vector<8x128xf32>
    %179 = arith.addf %178, %171 : vector<8x128xf32>
    %180 = arith.divf %171, %179 : vector<8x128xf32>
    %181 = arith.select %173, %177, %180 : vector<8x128xi1>, vector<8x128xf32>
    %182 = arith.mulf %167, %181 : vector<8x128xf32>
    %c0_95 = arith.constant 0 : index
    %c0_96 = arith.constant 0 : index
    %183 = vector.load %arg23[%c0_95, %c0_96] : memref<128x128xf32, #tpu.memory_space<vmem>>, vector<128x128xf32>
    %cst_97 = arith.constant dense<0.000000e+00> : vector<8x128xf32>
    %184 = tpu.matmul %182, %183, %cst_97 {dimension_numbers = #tpu.dot_dimension_numbers<[1], [0], [0], [1], [0, 0, 1, 1], [], []>} : vector<8x128xf32>, vector<128x128xf32>, vector<8x128xf32> -> vector<8x128xf32>
    %c0_98 = arith.constant 0 : index
    %c0_99 = arith.constant 0 : index
    %185 = vector.load %arg24[%c0_98, %c0_99] : memref<1x128xf32, #tpu.memory_space<vmem>>, vector<1x128xf32>
    %186 = vector.broadcast %185 : vector<1x128xf32> to vector<8x128xf32>
    %187 = arith.addf %184, %186 : vector<8x128xf32>
    %188 = math.absf %187 : vector<8x128xf32>
    %cst_100 = arith.constant 0.000000e+00 : f32
    %189 = vector.broadcast %cst_100 : f32 to vector<8x128xf32>
    %190 = arith.subf %189, %188 : vector<8x128xf32>
    %191 = math.exp %190 : vector<8x128xf32>
    %cst_101 = arith.constant 0.000000e+00 : f32
    %192 = vector.broadcast %cst_101 : f32 to vector<8x128xf32>
    %193 = arith.cmpf oge, %187, %192 : vector<8x128xf32>
    %cst_102 = arith.constant 1.000000e+00 : f32
    %194 = vector.broadcast %cst_102 : f32 to vector<8x128xf32>
    %195 = arith.addf %194, %191 : vector<8x128xf32>
    %cst_103 = arith.constant 1.000000e+00 : f32
    %196 = vector.broadcast %cst_103 : f32 to vector<8x128xf32>
    %197 = arith.divf %196, %195 : vector<8x128xf32>
    %cst_104 = arith.constant 1.000000e+00 : f32
    %198 = vector.broadcast %cst_104 : f32 to vector<8x128xf32>
    %199 = arith.addf %198, %191 : vector<8x128xf32>
    %200 = arith.divf %191, %199 : vector<8x128xf32>
    %201 = arith.select %193, %197, %200 : vector<8x128xi1>, vector<8x128xf32>
    %c0_105 = arith.constant 0 : index
    %c0_106 = arith.constant 0 : index
    %202 = vector.load %arg25[%c0_105, %c0_106] : memref<8x128xf32, #tpu.memory_space<vmem>>, vector<8x128xf32>
    tpu.vector_store %arg25[%c0_105, %c0_106], %85 {strides = array<i32>} : memref<8x128xf32, #tpu.memory_space<vmem>>, vector<8x128xf32>,
    %c0_107 = arith.constant 0 : index
    %c0_108 = arith.constant 0 : index
    %203 = vector.load %arg26[%c0_107, %c0_108] : memref<8x128xf32, #tpu.memory_space<vmem>>, vector<8x128xf32>
    tpu.vector_store %arg26[%c0_107, %c0_108], %99 {strides = array<i32>} : memref<8x128xf32, #tpu.memory_space<vmem>>, vector<8x128xf32>,
    %c0_109 = arith.constant 0 : index
    %c0_110 = arith.constant 0 : index
    %204 = vector.load %arg27[%c0_109, %c0_110] : memref<8x128xf32, #tpu.memory_space<vmem>>, vector<8x128xf32>
    tpu.vector_store %arg27[%c0_109, %c0_110], %102 {strides = array<i32>} : memref<8x128xf32, #tpu.memory_space<vmem>>, vector<8x128xf32>,
    %c0_111 = arith.constant 0 : index
    %c0_112 = arith.constant 0 : index
    %205 = vector.load %arg28[%c0_111, %c0_112] : memref<8x128xf32, #tpu.memory_space<vmem>>, vector<8x128xf32>
    tpu.vector_store %arg28[%c0_111, %c0_112], %201 {strides = array<i32>} : memref<8x128xf32, #tpu.memory_space<vmem>>, vector<8x128xf32>,
    %c8_i32 = arith.constant 8 : i32
    %206 = arith.muli %arg0, %c8_i32 : i32
    %207 = tpu.iota {dimensions = array<i32: 0>} : vector<8x1xi32>
    %208 = vector.broadcast %206 : i32 to vector<8x1xi32>
    %209 = arith.addi %208, %207 : vector<8x1xi32>
    %c8_i32_113 = arith.constant 8 : i32
    %210 = vector.broadcast %c8_i32_113 : i32 to vector<8x1xi32>
    %211 = arith.cmpi slt, %209, %210 : vector<8x1xi32>
    %212 = arith.extui %211 : vector<8x1xi1> to vector<8x1xi32>
    %213 = arith.sitofp %212 : vector<8x1xi32> to vector<8x1xf32>
    %214 = tpu.iota {dimensions = array<i32: 1>} : vector<1x128xi32>
    %c8_i32_114 = arith.constant 8 : i32
    %215 = vector.broadcast %c8_i32_114 : i32 to vector<1x128xi32>
    %216 = arith.cmpi slt, %214, %215 : vector<1x128xi32>
    %217 = arith.extui %216 : vector<1x128xi1> to vector<1x128xi32>
    %218 = arith.sitofp %217 : vector<1x128xi32> to vector<1x128xf32>
    %219 = tpu.iota {dimensions = array<i32: 1>} : vector<1x128xi32>
    %c64_i32 = arith.constant 64 : i32
    %220 = vector.broadcast %c64_i32 : i32 to vector<1x128xi32>
    %221 = arith.cmpi slt, %219, %220 : vector<1x128xi32>
    %222 = arith.extui %221 : vector<1x128xi1> to vector<1x128xi32>
    %223 = arith.sitofp %222 : vector<1x128xi32> to vector<1x128xf32>
    %224 = arith.mulf %99, %99 : vector<8x128xf32>
    %225 = arith.mulf %85, %85 : vector<8x128xf32>
    %226 = arith.addf %224, %225 : vector<8x128xf32>
    %cst_115 = arith.constant 1.000000e+00 : f32
    %227 = vector.broadcast %cst_115 : f32 to vector<8x128xf32>
    %228 = arith.subf %226, %227 : vector<8x128xf32>
    %229 = math.log %99 : vector<8x128xf32>
    %cst_116 = arith.constant 2.000000e+00 : f32
    %230 = vector.broadcast %cst_116 : f32 to vector<8x128xf32>
    %231 = arith.mulf %230, %229 : vector<8x128xf32>
    %232 = arith.subf %228, %231 : vector<8x128xf32>
    %cst_117 = arith.constant 5.000000e-01 : f32
    %233 = vector.broadcast %cst_117 : f32 to vector<8x128xf32>
    %234 = arith.mulf %233, %232 : vector<8x128xf32>
    %235 = vector.broadcast %213 : vector<8x1xf32> to vector<8x128xf32>
    %236 = vector.broadcast %218 : vector<1x128xf32> to vector<8x128xf32>
    %237 = arith.mulf %235, %236 : vector<8x128xf32>
    %238 = arith.mulf %234, %237 : vector<8x128xf32>
    %239 = vector.shape_cast %238 : vector<8x128xf32> to vector<1x8x128xf32>
    %cst_118 = arith.constant dense<0.000000e+00> : vector<1xf32>
    %240 = vector.multi_reduction <add>, %239, %cst_118 [1, 2] : vector<1x8x128xf32> to vector<1xf32>
    %241 = vector.shape_cast %240 : vector<1xf32> to vector<1x1x1xf32>
    %242 = vector.extract %241[0, 0, 0] : f32 from vector<1x1x1xf32>
    %cst_119 = arith.constant 5.000000e-01 : f32
    %243 = vector.broadcast %cst_119 : f32 to vector<8x128xf32>
    %244 = arith.addf %0, %243 : vector<8x128xf32>
    %cst_120 = arith.constant 0.000000e+00 : f32
    %245 = vector.broadcast %cst_120 : f32 to vector<8x128xf32>
    %246 = arith.subf %245, %187 : vector<8x128xf32>
    %cst_121 = arith.constant 2.000000e+01 : f32
    %247 = vector.broadcast %cst_121 : f32 to vector<8x128xf32>
    %248 = arith.cmpf ogt, %246, %247 : vector<8x128xf32>
    %cst_122 = arith.constant 2.000000e+01 : f32
    %249 = vector.broadcast %cst_122 : f32 to vector<8x128xf32>
    %250 = arith.minimumf %246, %249 : vector<8x128xf32>
    %251 = math.exp %250 : vector<8x128xf32>
    %252 = math.log1p %251 : vector<8x128xf32>
    %253 = arith.select %248, %246, %252 : vector<8x128xi1>, vector<8x128xf32>
    %cst_123 = arith.constant 0.000000e+00 : f32
    %254 = vector.broadcast %cst_123 : f32 to vector<8x128xf32>
    %255 = arith.subf %254, %253 : vector<8x128xf32>
    %cst_124 = arith.constant -1.000000e+02 : f32
    %256 = vector.broadcast %cst_124 : f32 to vector<8x128xf32>
    %257 = arith.maximumf %255, %256 : vector<8x128xf32>
    %cst_125 = arith.constant 2.000000e+01 : f32
    %258 = vector.broadcast %cst_125 : f32 to vector<8x128xf32>
    %259 = arith.cmpf ogt, %187, %258 : vector<8x128xf32>
    %cst_126 = arith.constant 2.000000e+01 : f32
    %260 = vector.broadcast %cst_126 : f32 to vector<8x128xf32>
    %261 = arith.minimumf %187, %260 : vector<8x128xf32>
    %262 = math.exp %261 : vector<8x128xf32>
    %263 = math.log1p %262 : vector<8x128xf32>
    %264 = arith.select %259, %187, %263 : vector<8x128xi1>, vector<8x128xf32>
    %cst_127 = arith.constant 0.000000e+00 : f32
    %265 = vector.broadcast %cst_127 : f32 to vector<8x128xf32>
    %266 = arith.subf %265, %264 : vector<8x128xf32>
    %cst_128 = arith.constant -1.000000e+02 : f32
    %267 = vector.broadcast %cst_128 : f32 to vector<8x128xf32>
    %268 = arith.maximumf %266, %267 : vector<8x128xf32>
    %269 = arith.mulf %244, %257 : vector<8x128xf32>
    %cst_129 = arith.constant 1.000000e+00 : f32
    %270 = vector.broadcast %cst_129 : f32 to vector<8x128xf32>
    %271 = arith.subf %270, %244 : vector<8x128xf32>
    %272 = arith.mulf %271, %268 : vector<8x128xf32>
    %273 = arith.addf %269, %272 : vector<8x128xf32>
    %cst_130 = arith.constant 0.000000e+00 : f32
    %274 = vector.broadcast %cst_130 : f32 to vector<8x128xf32>
    %275 = arith.subf %274, %273 : vector<8x128xf32>
    %276 = vector.broadcast %213 : vector<8x1xf32> to vector<8x128xf32>
    %277 = vector.broadcast %223 : vector<1x128xf32> to vector<8x128xf32>
    %278 = arith.mulf %276, %277 : vector<8x128xf32>
    %279 = arith.mulf %275, %278 : vector<8x128xf32>
    %280 = vector.shape_cast %279 : vector<8x128xf32> to vector<1x8x128xf32>
    %cst_131 = arith.constant dense<0.000000e+00> : vector<1xf32>
    %281 = vector.multi_reduction <add>, %280, %cst_131 [1, 2] : vector<1x8x128xf32> to vector<1xf32>
    %282 = vector.shape_cast %281 : vector<1xf32> to vector<1x1x1xf32>
    %283 = vector.extract %282[0, 0, 0] : f32 from vector<1x1x1xf32>
    %284 = tpu.iota {dimensions = array<i32: 0>} : vector<8x128xi32>
    %285 = tpu.iota {dimensions = array<i32: 1>} : vector<8x128xi32>
    %c0_i32 = arith.constant 0 : i32
    %286 = vector.broadcast %c0_i32 : i32 to vector<8x128xi32>
    %287 = arith.cmpi eq, %284, %286 : vector<8x128xi32>
    %c0_i32_132 = arith.constant 0 : i32
    %288 = vector.broadcast %c0_i32_132 : i32 to vector<8x128xi32>
    %289 = arith.cmpi eq, %285, %288 : vector<8x128xi32>
    %290 = arith.andi %287, %289 : vector<8x128xi1>
    %c0_i32_133 = arith.constant 0 : i32
    %291 = vector.broadcast %c0_i32_133 : i32 to vector<8x128xi32>
    %292 = arith.cmpi eq, %284, %291 : vector<8x128xi32>
    %c1_i32 = arith.constant 1 : i32
    %293 = vector.broadcast %c1_i32 : i32 to vector<8x128xi32>
    %294 = arith.cmpi eq, %285, %293 : vector<8x128xi32>
    %295 = arith.andi %292, %294 : vector<8x128xi1>
    %cst_134 = arith.constant 0.000000e+00 : f32
    %296 = vector.broadcast %242 : f32 to vector<8x128xf32>
    %297 = vector.broadcast %cst_134 : f32 to vector<8x128xf32>
    %298 = arith.select %295, %296, %297 : vector<8x128xi1>, vector<8x128xf32>
    %299 = vector.broadcast %283 : f32 to vector<8x128xf32>
    %300 = arith.select %290, %299, %298 : vector<8x128xi1>, vector<8x128xf32>
    %301 = vector.shape_cast %300 : vector<8x128xf32> to vector<1x8x128xf32>
    %c0_135 = arith.constant 0 : index
    %c0_136 = arith.constant 0 : index
    %c0_137 = arith.constant 0 : index
    %302 = vector.load %arg29[%c0_135, %c0_136, %c0_137] : memref<1x8x128xf32, #tpu.memory_space<vmem>>, vector<1x8x128xf32>
    tpu.vector_store %arg29[%c0_135, %c0_136, %c0_137], %301 {strides = array<i32>} : memref<1x8x128xf32, #tpu.memory_space<vmem>>, vector<1x8x128xf32>,
    return
  }
  func.func @transform_0(%arg0: i32) -> (i32, i32) {
    %c0_i32 = arith.constant 0 : i32
    %c0_i32_0 = arith.constant 0 : i32
    return %arg0, %c0_i32 : i32, i32
  }
  func.func @transform_1(%arg0: i32) -> (i32, i32) {
    %c0_i32 = arith.constant 0 : i32
    %c0_i32_0 = arith.constant 0 : i32
    return %arg0, %c0_i32 : i32, i32
  }
  func.func @transform_2(%arg0: i32) -> (i32, i32) {
    %c0_i32 = arith.constant 0 : i32
    %c0_i32_0 = arith.constant 0 : i32
    %c0_i32_1 = arith.constant 0 : i32
    return %c0_i32, %c0_i32_0 : i32, i32
  }
  func.func @transform_3(%arg0: i32) -> (i32, i32) {
    %c0_i32 = arith.constant 0 : i32
    %c0_i32_0 = arith.constant 0 : i32
    %c0_i32_1 = arith.constant 0 : i32
    return %c0_i32, %c0_i32_0 : i32, i32
  }
  func.func @transform_4(%arg0: i32) -> (i32, i32) {
    %c0_i32 = arith.constant 0 : i32
    %c0_i32_0 = arith.constant 0 : i32
    %c0_i32_1 = arith.constant 0 : i32
    return %c0_i32, %c0_i32_0 : i32, i32
  }
  func.func @transform_5(%arg0: i32) -> (i32, i32) {
    %c0_i32 = arith.constant 0 : i32
    %c0_i32_0 = arith.constant 0 : i32
    %c0_i32_1 = arith.constant 0 : i32
    return %c0_i32, %c0_i32_0 : i32, i32
  }
  func.func @transform_6(%arg0: i32) -> (i32, i32) {
    %c0_i32 = arith.constant 0 : i32
    %c0_i32_0 = arith.constant 0 : i32
    %c0_i32_1 = arith.constant 0 : i32
    return %c0_i32, %c0_i32_0 : i32, i32
  }
  func.func @transform_7(%arg0: i32) -> (i32, i32) {
    %c0_i32 = arith.constant 0 : i32
    %c0_i32_0 = arith.constant 0 : i32
    %c0_i32_1 = arith.constant 0 : i32
    return %c0_i32, %c0_i32_0 : i32, i32
  }
  func.func @transform_8(%arg0: i32) -> (i32, i32) {
    %c0_i32 = arith.constant 0 : i32
    %c0_i32_0 = arith.constant 0 : i32
    %c0_i32_1 = arith.constant 0 : i32
    return %c0_i32, %c0_i32_0 : i32, i32
  }
  func.func @transform_9(%arg0: i32) -> (i32, i32) {
    %c0_i32 = arith.constant 0 : i32
    %c0_i32_0 = arith.constant 0 : i32
    %c0_i32_1 = arith.constant 0 : i32
    return %c0_i32, %c0_i32_0 : i32, i32
  }
  func.func @transform_10(%arg0: i32) -> (i32, i32) {
    %c0_i32 = arith.constant 0 : i32
    %c0_i32_0 = arith.constant 0 : i32
    %c0_i32_1 = arith.constant 0 : i32
    return %c0_i32, %c0_i32_0 : i32, i32
  }
  func.func @transform_11(%arg0: i32) -> (i32, i32) {
    %c0_i32 = arith.constant 0 : i32
    %c0_i32_0 = arith.constant 0 : i32
    %c0_i32_1 = arith.constant 0 : i32
    return %c0_i32, %c0_i32_0 : i32, i32
  }
  func.func @transform_12(%arg0: i32) -> (i32, i32) {
    %c0_i32 = arith.constant 0 : i32
    %c0_i32_0 = arith.constant 0 : i32
    %c0_i32_1 = arith.constant 0 : i32
    return %c0_i32, %c0_i32_0 : i32, i32
  }
  func.func @transform_13(%arg0: i32) -> (i32, i32) {
    %c0_i32 = arith.constant 0 : i32
    %c0_i32_0 = arith.constant 0 : i32
    %c0_i32_1 = arith.constant 0 : i32
    return %c0_i32, %c0_i32_0 : i32, i32
  }
  func.func @transform_14(%arg0: i32) -> (i32, i32) {
    %c0_i32 = arith.constant 0 : i32
    %c0_i32_0 = arith.constant 0 : i32
    %c0_i32_1 = arith.constant 0 : i32
    return %c0_i32, %c0_i32_0 : i32, i32
  }
  func.func @transform_15(%arg0: i32) -> (i32, i32) {
    %c0_i32 = arith.constant 0 : i32
    %c0_i32_0 = arith.constant 0 : i32
    %c0_i32_1 = arith.constant 0 : i32
    return %c0_i32, %c0_i32_0 : i32, i32
  }
  func.func @transform_16(%arg0: i32) -> (i32, i32) {
    %c0_i32 = arith.constant 0 : i32
    %c0_i32_0 = arith.constant 0 : i32
    %c0_i32_1 = arith.constant 0 : i32
    return %c0_i32, %c0_i32_0 : i32, i32
  }
  func.func @transform_17(%arg0: i32) -> (i32, i32) {
    %c0_i32 = arith.constant 0 : i32
    %c0_i32_0 = arith.constant 0 : i32
    %c0_i32_1 = arith.constant 0 : i32
    return %c0_i32, %c0_i32_0 : i32, i32
  }
  func.func @transform_18(%arg0: i32) -> (i32, i32) {
    %c0_i32 = arith.constant 0 : i32
    %c0_i32_0 = arith.constant 0 : i32
    %c0_i32_1 = arith.constant 0 : i32
    return %c0_i32, %c0_i32_0 : i32, i32
  }
  func.func @transform_19(%arg0: i32) -> (i32, i32) {
    %c0_i32 = arith.constant 0 : i32
    %c0_i32_0 = arith.constant 0 : i32
    %c0_i32_1 = arith.constant 0 : i32
    return %c0_i32, %c0_i32_0 : i32, i32
  }
  func.func @transform_20(%arg0: i32) -> (i32, i32) {
    %c0_i32 = arith.constant 0 : i32
    %c0_i32_0 = arith.constant 0 : i32
    %c0_i32_1 = arith.constant 0 : i32
    return %c0_i32, %c0_i32_0 : i32, i32
  }
  func.func @transform_21(%arg0: i32) -> (i32, i32) {
    %c0_i32 = arith.constant 0 : i32
    %c0_i32_0 = arith.constant 0 : i32
    %c0_i32_1 = arith.constant 0 : i32
    return %c0_i32, %c0_i32_0 : i32, i32
  }
  func.func @transform_22(%arg0: i32) -> (i32, i32) {
    %c0_i32 = arith.constant 0 : i32
    %c0_i32_0 = arith.constant 0 : i32
    %c0_i32_1 = arith.constant 0 : i32
    return %c0_i32, %c0_i32_0 : i32, i32
  }
  func.func @transform_23(%arg0: i32) -> (i32, i32) {
    %c0_i32 = arith.constant 0 : i32
    %c0_i32_0 = arith.constant 0 : i32
    %c0_i32_1 = arith.constant 0 : i32
    return %c0_i32, %c0_i32_0 : i32, i32
  }
  func.func @transform_24(%arg0: i32) -> (i32, i32) {
    %c0_i32 = arith.constant 0 : i32
    %c0_i32_0 = arith.constant 0 : i32
    return %arg0, %c0_i32 : i32, i32
  }
  func.func @transform_25(%arg0: i32) -> (i32, i32) {
    %c0_i32 = arith.constant 0 : i32
    %c0_i32_0 = arith.constant 0 : i32
    return %arg0, %c0_i32 : i32, i32
  }
  func.func @transform_26(%arg0: i32) -> (i32, i32) {
    %c0_i32 = arith.constant 0 : i32
    %c0_i32_0 = arith.constant 0 : i32
    return %arg0, %c0_i32 : i32, i32
  }
  func.func @transform_27(%arg0: i32) -> (i32, i32) {
    %c0_i32 = arith.constant 0 : i32
    %c0_i32_0 = arith.constant 0 : i32
    return %arg0, %c0_i32 : i32, i32
  }
  func.func @transform_28(%arg0: i32) -> (i32, i32, i32) {
    %c0_i32 = arith.constant 0 : i32
    %c0_i32_0 = arith.constant 0 : i32
    %c0_i32_1 = arith.constant 0 : i32
    return %arg0, %c0_i32, %c0_i32_0 : i32, i32, i32
  }
}

</mosaic_0001>

<llo_original>
// kernel: tpu_custom_call.1
$region0: #{tpu_custom_call.1}
  #allocation0 [shape = 'u32[]', space=smem, size = 0x4, offset = 0x4, fixed_abs, tag = 'smem constant byte address 0x4 - core index']
  #allocation1 [shape = 'u32[72,128]{1,0:T(1,128)}', space=vmem, size = 0x9000, scoped, tag = 'internal scratch']
  %s0 = inlined_call_operand.hbm [shape: f32[8,128], index: 0, kind: input, shape index: {}]
  %s1 = inlined_call_operand.hbm [shape: f32[8,128], index: 1, kind: input, shape index: {}]
  %s2 = inlined_call_operand.hbm [shape: f32[128,128], index: 2, kind: input, shape index: {}]
  %s3 = inlined_call_operand.vmem [shape: f32[1,128], index: 3, kind: input, shape index: {}]
  %s4 = inlined_call_operand.hbm [shape: f32[128,128], index: 4, kind: input, shape index: {}]
  %s5 = inlined_call_operand.vmem [shape: f32[1,128], index: 5, kind: input, shape index: {}]
  %s6 = inlined_call_operand.hbm [shape: f32[128,128], index: 6, kind: input, shape index: {}]
  %s7 = inlined_call_operand.vmem [shape: f32[1,128], index: 7, kind: input, shape index: {}]
  %s8 = inlined_call_operand.hbm [shape: f32[128,128], index: 8, kind: input, shape index: {}]
  %s9 = inlined_call_operand.vmem [shape: f32[1,128], index: 9, kind: input, shape index: {}]
  %s10 = inlined_call_operand.hbm [shape: f32[128,128], index: 10, kind: input, shape index: {}]
  %s11 = inlined_call_operand.vmem [shape: f32[1,128], index: 11, kind: input, shape index: {}]
  %s12 = inlined_call_operand.hbm [shape: f32[128,128], index: 12, kind: input, shape index: {}]
  %s13 = inlined_call_operand.vmem [shape: f32[1,128], index: 13, kind: input, shape index: {}]
  %s14 = inlined_call_operand.hbm [shape: f32[128,128], index: 14, kind: input, shape index: {}]
  %s15 = inlined_call_operand.vmem [shape: f32[1,128], index: 15, kind: input, shape index: {}]
  %s16 = inlined_call_operand.hbm [shape: f32[128,128], index: 16, kind: input, shape index: {}]
  %s17 = inlined_call_operand.vmem [shape: f32[1,128], index: 17, kind: input, shape index: {}]
  %s18 = inlined_call_operand.hbm [shape: f32[128,128], index: 18, kind: input, shape index: {}]
  %s19 = inlined_call_operand.vmem [shape: f32[1,128], index: 19, kind: input, shape index: {}]
  %s20 = inlined_call_operand.hbm [shape: f32[128,128], index: 20, kind: input, shape index: {}]
  %s21 = inlined_call_operand.vmem [shape: f32[1,128], index: 21, kind: input, shape index: {}]
  %s22 = inlined_call_operand.hbm [shape: f32[128,128], index: 22, kind: input, shape index: {}]
  %s23 = inlined_call_operand.vmem [shape: f32[1,128], index: 23, kind: input, shape index: {}]
  %s24 = inlined_call_operand.hbm [shape: f32[8,128], index: 24, kind: output, shape index: {0}]
  %s25 = inlined_call_operand.hbm [shape: f32[8,128], index: 25, kind: output, shape index: {1}]
  %s26 = inlined_call_operand.hbm [shape: f32[8,128], index: 26, kind: output, shape index: {2}]
  %s27 = inlined_call_operand.hbm [shape: f32[8,128], index: 27, kind: output, shape index: {3}]
  %s28 = inlined_call_operand.hbm [shape: f32[1,8,128], index: 28, kind: output, shape index: {4}]
  %29 = xla_tuple %s24, %s25, %s26, %s27, %s28
  %s30 = sld [smem:[#allocation0]]
  $region190: #{tpu_custom_call.1} parent=0
    _
  %s32 = ssub.s32 1, %s30
  %s33 = scalar_select 0, %s32, %s30
  $region1: #{tpu_custom_call.1} parent=0
    #allocation2 [shape = 'u8[4096]{0}', space=vmem, size = 0x1000, scoped, tag = 'input window, operand 0, single buffered']
    #allocation3 [shape = 's32[1]{0}', space=sflag, size = 0x4, scoped, tag = 'scoped memory for tpu_custom_call.1']
    #allocation4 [shape = 's32[1]{0}', space=sflag, size = 0x4, scoped, tag = 'scoped memory for tpu_custom_call.1']
    #allocation5 [shape = 'u8[4096]{0}', space=vmem, size = 0x1000, scoped, tag = 'input window, operand 1, single buffered']
    #allocation6 [shape = 's32[1]{0}', space=sflag, size = 0x4, scoped, tag = 'scoped memory for tpu_custom_call.1']
    #allocation7 [shape = 'u8[65536]{0}', space=vmem, size = 0x10000, scoped, tag = 'input window, operand 2, single buffered']
    #allocation8 [shape = 'u8[65536]{0}', space=vmem, size = 0x10000, scoped, tag = 'input window, operand 4, single buffered']
    #allocation9 [shape = 's32[1]{0}', space=sflag, size = 0x4, scoped, tag = 'scoped memory for tpu_custom_call.1']
    #allocation10 [shape = 'u8[65536]{0}', space=vmem, size = 0x10000, scoped, tag = 'input window, operand 6, single buffered']
    #allocation11 [shape = 'u8[65536]{0}', space=vmem, size = 0x10000, scoped, tag = 'input window, operand 8, single buffered']
    #allocation12 [shape = 's32[1]{0}', space=sflag, size = 0x4, scoped, tag = 'scoped memory for tpu_custom_call.1']
    #allocation13 [shape = 'u8[65536]{0}', space=vmem, size = 0x10000, scoped, tag = 'input window, operand 10, single buffered']
    #allocation14 [shape = 'u8[65536]{0}', space=vmem, size = 0x10000, scoped, tag = 'input window, operand 12, single buffered']
    #allocation15 [shape = 's32[1]{0}', space=sflag, size = 0x4, scoped, tag = 'scoped memory for tpu_custom_call.1']
    #allocation16 [shape = 'u8[65536]{0}', space=vmem, size = 0x10000, scoped, tag = 'input window, operand 14, single buffered']
    #allocation17 [shape = 'u8[65536]{0}', space=vmem, size = 0x10000, scoped, tag = 'input window, operand 16, single buffered']
    #allocation18 [shape = 's32[1]{0}', space=sflag, size = 0x4, scoped, tag = 'scoped memory for tpu_custom_call.1']
    #allocation19 [shape = 'u8[65536]{0}', space=vmem, size = 0x10000, scoped, tag = 'input window, operand 18, single buffered']
    #allocation20 [shape = 'u8[65536]{0}', space=vmem, size = 0x10000, scoped, tag = 'input window, operand 20, single buffered']
    #allocation21 [shape = 's32[1]{0}', space=sflag, size = 0x4, scoped, tag = 'scoped memory for tpu_custom_call.1']
    #allocation22 [shape = 'u8[65536]{0}', space=vmem, size = 0x10000, scoped, tag = 'input window, operand 22, single buffered']
    #allocation23 [shape = 'u8[4096]{0}', space=vmem, size = 0x1000, scoped, tag = 'output window, operand 0, single buffered']
    #allocation24 [shape = 'u8[4096]{0}', space=vmem, size = 0x1000, scoped, tag = 'output window, operand 1, single buffered']
    #allocation25 [shape = 's32[1]{0}', space=sflag, size = 0x4, scoped, tag = 'scoped memory for tpu_custom_call.1']
    #allocation26 [shape = 'u8[4096]{0}', space=vmem, size = 0x1000, scoped, tag = 'output window, operand 2, single buffered']
    #allocation27 [shape = 'u8[4096]{0}', space=vmem, size = 0x1000, scoped, tag = 'output window, operand 3, single buffered']
    #allocation28 [shape = 's32[1]{0}', space=sflag, size = 0x4, scoped, tag = 'scoped memory for tpu_custom_call.1']
    #allocation29 [shape = 'u8[4096]{0}', space=vmem, size = 0x1000, scoped, tag = 'output window, operand 4, single buffered']
    %34 = vsyncpa [#allocation3], 0
    %35 = vsyncpa [#allocation6], 0
    %36 = vsyncpa [#allocation9], 0
    %37 = vsyncpa [#allocation12], 0
    %38 = vsyncpa [#allocation15], 0
    %39 = vsyncpa [#allocation18], 0
    %40 = vsyncpa [#allocation21], 0
    %41 = vsyncpa [#allocation4], 0
    %42 = vsyncpa [#allocation25], 0
    %43 = vsyncpa [#allocation28], 0
    // Predicated region
    $region2: #{tpu_custom_call.1} parent=1 // pred_check
      _
    $region3: #{tpu_custom_call.1} parent=1 // pred_check_branch
      %45 = sbr.rel (0) target = $region5
    $region4: #{tpu_custom_call.1} parent=1 // pred_region
      %47 = vsyncadd [#allocation3], 0
      %s49 = sshll.u32 %s0, 4
      %s50 = int_to_ptr.hbm [resolvable:$true] %s49
      %s51 = sshll.u32 [#allocation2], 4
      %s52 = int_to_ptr.vmem [resolvable:$true] %s51
      %54 = dma.hbm_to_vmem [thread:$0]  %s50, 128, %s52, [#allocation3]
    $region5: #{tpu_custom_call.1} parent=1 // pred_fallthru
      _
    // Predicated region
    $region6: #{tpu_custom_call.1} parent=1 // pred_check
      _
    $region7: #{tpu_custom_call.1} parent=1 // pred_check_branch
      %56 = sbr.rel (0) target = $region9
    $region8: #{tpu_custom_call.1} parent=1 // pred_region
      %58 = vsyncadd [#allocation6], 0
      %s60 = sshll.u32 %s1, 4
      %s61 = int_to_ptr.hbm [resolvable:$true] %s60
      %s62 = sshll.u32 [#allocation5], 4
      %s63 = int_to_ptr.vmem [resolvable:$true] %s62
      %65 = dma.hbm_to_vmem [thread:$0]  %s61, 128, %s63, [#allocation6]
    $region9: #{tpu_custom_call.1} parent=1 // pred_fallthru
      _
    // Predicated region
    $region10: #{tpu_custom_call.1} parent=1 // pred_check
      _
    $region11: #{tpu_custom_call.1} parent=1 // pred_check_branch
      %67 = sbr.rel (0) target = $region13
    $region12: #{tpu_custom_call.1} parent=1 // pred_region
      %69 = vsyncadd [#allocation6], 0
      %s70 = sshll.u32 %s2, 4
      %s71 = int_to_ptr.hbm [resolvable:$true] %s70
      %s72 = sshll.u32 [#allocation7], 4
      %s73 = int_to_ptr.vmem [resolvable:$true] %s72
      %78 = dma.hbm_to_vmem [thread:$0]  %s71, 2048, %s73, [#allocation6], 128, 128, 8
    $region13: #{tpu_custom_call.1} parent=1 // pred_fallthru
      _
    // Predicated region
    $region14: #{tpu_custom_call.1} parent=1 // pred_check
      _
    $region15: #{tpu_custom_call.1} parent=1 // pred_check_branch
      %80 = sbr.rel (0) target = $region17
    $region16: #{tpu_custom_call.1} parent=1 // pred_region
      _
    $region17: #{tpu_custom_call.1} parent=1 // pred_fallthru
      _
    // Predicated region
    $region18: #{tpu_custom_call.1} parent=1 // pred_check
      _
    $region19: #{tpu_custom_call.1} parent=1 // pred_check_branch
      %82 = sbr.rel (0) target = $region21
    $region20: #{tpu_custom_call.1} parent=1 // pred_region
      %84 = vsyncadd [#allocation9], 0
      %s85 = sshll.u32 %s4, 4
      %s86 = int_to_ptr.hbm [resolvable:$true] %s85
      %s87 = sshll.u32 [#allocation8], 4
      %s88 = int_to_ptr.vmem [resolvable:$true] %s87
      %93 = dma.hbm_to_vmem [thread:$0]  %s86, 2048, %s88, [#allocation9], 128, 128, 8
    $region21: #{tpu_custom_call.1} parent=1 // pred_fallthru
      _
    // Predicated region
    $region22: #{tpu_custom_call.1} parent=1 // pred_check
      _
    $region23: #{tpu_custom_call.1} parent=1 // pred_check_branch
      %95 = sbr.rel (0) target = $region25
    $region24: #{tpu_custom_call.1} parent=1 // pred_region
      _
    $region25: #{tpu_custom_call.1} parent=1 // pred_fallthru
      _
    // Predicated region
    $region26: #{tpu_custom_call.1} parent=1 // pred_check
      _
    $region27: #{tpu_custom_call.1} parent=1 // pred_check_branch
      %97 = sbr.rel (0) target = $region29
    $region28: #{tpu_custom_call.1} parent=1 // pred_region
      %99 = vsyncadd [#allocation9], 0
      %s100 = sshll.u32 %s6, 4
      %s101 = int_to_ptr.hbm [resolvable:$true] %s100
      %s102 = sshll.u32 [#allocation10], 4
      %s103 = int_to_ptr.vmem [resolvable:$true] %s102
      %108 = dma.hbm_to_vmem [thread:$0]  %s101, 2048, %s103, [#allocation9], 128, 128, 8
    $region29: #{tpu_custom_call.1} parent=1 // pred_fallthru
      _
    // Predicated region
    $region30: #{tpu_custom_call.1} parent=1 // pred_check
      _
    $region31: #{tpu_custom_call.1} parent=1 // pred_check_branch
      %110 = sbr.rel (0) target = $region33
    $region32: #{tpu_custom_call.1} parent=1 // pred_region
      _
    $region33: #{tpu_custom_call.1} parent=1 // pred_fallthru
      _
    // Predicated region
    $region34: #{tpu_custom_call.1} parent=1 // pred_check
      _
    $region35: #{tpu_custom_call.1} parent=1 // pred_check_branch
      %112 = sbr.rel (0) target = $region37
    $region36: #{tpu_custom_call.1} parent=1 // pred_region
      %114 = vsyncadd [#allocation12], 0
      %s115 = sshll.u32 %s8, 4
      %s116 = int_to_ptr.hbm [resolvable:$true] %s115
      %s117 = sshll.u32 [#allocation11], 4
      %s118 = int_to_ptr.vmem [resolvable:$true] %s117
      %123 = dma.hbm_to_vmem [thread:$0]  %s116, 2048, %s118, [#allocation12], 128, 128, 8
    $region37: #{tpu_custom_call.1} parent=1 // pred_fallthru
      _
    // Predicated region
    $region38: #{tpu_custom_call.1} parent=1 // pred_check
      _
    $region39: #{tpu_custom_call.1} parent=1 // pred_check_branch
      %125 = sbr.rel (0) target = $region41
    $region40: #{tpu_custom_call.1} parent=1 // pred_region
      _
    $region41: #{tpu_custom_call.1} parent=1 // pred_fallthru
      _
    // Predicated region
    $region42: #{tpu_custom_call.1} parent=1 // pred_check
      _
    $region43: #{tpu_custom_call.1} parent=1 // pred_check_branch
      %127 = sbr.rel (0) target = $region45
    $region44: #{tpu_custom_call.1} parent=1 // pred_region
      %129 = vsyncadd [#allocation12], 0
      %s130 = sshll.u32 %s10, 4
      %s131 = int_to_ptr.hbm [resolvable:$true] %s130
      %s132 = sshll.u32 [#allocation13], 4
      %s133 = int_to_ptr.vmem [resolvable:$true] %s132
      %138 = dma.hbm_to_vmem [thread:$0]  %s131, 2048, %s133, [#allocation12], 128, 128, 8
    $region45: #{tpu_custom_call.1} parent=1 // pred_fallthru
      _
    // Predicated region
    $region46: #{tpu_custom_call.1} parent=1 // pred_check
      _
    $region47: #{tpu_custom_call.1} parent=1 // pred_check_branch
      %140 = sbr.rel (0) target = $region49
    $region48: #{tpu_custom_call.1} parent=1 // pred_region
      _
    $region49: #{tpu_custom_call.1} parent=1 // pred_fallthru
      _
    // Predicated region
    $region50: #{tpu_custom_call.1} parent=1 // pred_check
      _
    $region51: #{tpu_custom_call.1} parent=1 // pred_check_branch
      %142 = sbr.rel (0) target = $region53
    $region52: #{tpu_custom_call.1} parent=1 // pred_region
      %144 = vsyncadd [#allocation15], 0
      %s145 = sshll.u32 %s12, 4
      %s146 = int_to_ptr.hbm [resolvable:$true] %s145
      %s147 = sshll.u32 [#allocation14], 4
      %s148 = int_to_ptr.vmem [resolvable:$true] %s147
      %153 = dma.hbm_to_vmem [thread:$0]  %s146, 2048, %s148, [#allocation15], 128, 128, 8
    $region53: #{tpu_custom_call.1} parent=1 // pred_fallthru
      _
    // Predicated region
    $region54: #{tpu_custom_call.1} parent=1 // pred_check
      _
    $region55: #{tpu_custom_call.1} parent=1 // pred_check_branch
      %155 = sbr.rel (0) target = $region57
    $region56: #{tpu_custom_call.1} parent=1 // pred_region
      _
    $region57: #{tpu_custom_call.1} parent=1 // pred_fallthru
      _
    // Predicated region
    $region58: #{tpu_custom_call.1} parent=1 // pred_check
      _
    $region59: #{tpu_custom_call.1} parent=1 // pred_check_branch
      %157 = sbr.rel (0) target = $region61
    $region60: #{tpu_custom_call.1} parent=1 // pred_region
      %159 = vsyncadd [#allocation15], 0
      %s160 = sshll.u32 %s14, 4
      %s161 = int_to_ptr.hbm [resolvable:$true] %s160
      %s162 = sshll.u32 [#allocation16], 4
      %s163 = int_to_ptr.vmem [resolvable:$true] %s162
      %168 = dma.hbm_to_vmem [thread:$0]  %s161, 2048, %s163, [#allocation15], 128, 128, 8
    $region61: #{tpu_custom_call.1} parent=1 // pred_fallthru
      _
    // Predicated region
    $region62: #{tpu_custom_call.1} parent=1 // pred_check
      _
    $region63: #{tpu_custom_call.1} parent=1 // pred_check_branch
      %170 = sbr.rel (0) target = $region65
    $region64: #{tpu_custom_call.1} parent=1 // pred_region
      _
    $region65: #{tpu_custom_call.1} parent=1 // pred_fallthru
      _
    // Predicated region
    $region66: #{tpu_custom_call.1} parent=1 // pred_check
      _
    $region67: #{tpu_custom_call.1} parent=1 // pred_check_branch
      %172 = sbr.rel (0) target = $region69
    $region68: #{tpu_custom_call.1} parent=1 // pred_region
      %174 = vsyncadd [#allocation18], 0
      %s175 = sshll.u32 %s16, 4
      %s176 = int_to_ptr.hbm [resolvable:$true] %s175
      %s177 = sshll.u32 [#allocation17], 4
      %s178 = int_to_ptr.vmem [resolvable:$true] %s177
      %183 = dma.hbm_to_vmem [thread:$0]  %s176, 2048, %s178, [#allocation18], 128, 128, 8
    $region69: #{tpu_custom_call.1} parent=1 // pred_fallthru
      _
    // Predicated region
    $region70: #{tpu_custom_call.1} parent=1 // pred_check
      _
    $region71: #{tpu_custom_call.1} parent=1 // pred_check_branch
      %185 = sbr.rel (0) target = $region73
    $region72: #{tpu_custom_call.1} parent=1 // pred_region
      _
    $region73: #{tpu_custom_call.1} parent=1 // pred_fallthru
      _
    // Predicated region
    $region74: #{tpu_custom_call.1} parent=1 // pred_check
      _
    $region75: #{tpu_custom_call.1} parent=1 // pred_check_branch
      %187 = sbr.rel (0) target = $region77
    $region76: #{tpu_custom_call.1} parent=1 // pred_region
      %189 = vsyncadd [#allocation18], 0
      %s190 = sshll.u32 %s18, 4
      %s191 = int_to_ptr.hbm [resolvable:$true] %s190
      %s192 = sshll.u32 [#allocation19], 4
      %s193 = int_to_ptr.vmem [resolvable:$true] %s192
      %198 = dma.hbm_to_vmem [thread:$0]  %s191, 2048, %s193, [#allocation18], 128, 128, 8
    $region77: #{tpu_custom_call.1} parent=1 // pred_fallthru
      _
    // Predicated region
    $region78: #{tpu_custom_call.1} parent=1 // pred_check
      _
    $region79: #{tpu_custom_call.1} parent=1 // pred_check_branch
      %200 = sbr.rel (0) target = $region81
    $region80: #{tpu_custom_call.1} parent=1 // pred_region
      _
    $region81: #{tpu_custom_call.1} parent=1 // pred_fallthru
      _
    // Predicated region
    $region82: #{tpu_custom_call.1} parent=1 // pred_check
      _
    $region83: #{tpu_custom_call.1} parent=1 // pred_check_branch
      %202 = sbr.rel (0) target = $region85
    $region84: #{tpu_custom_call.1} parent=1 // pred_region
      %204 = vsyncadd [#allocation21], 0
      %s205 = sshll.u32 %s20, 4
      %s206 = int_to_ptr.hbm [resolvable:$true] %s205
      %s207 = sshll.u32 [#allocation20], 4
      %s208 = int_to_ptr.vmem [resolvable:$true] %s207
      %213 = dma.hbm_to_vmem [thread:$0]  %s206, 2048, %s208, [#allocation21], 128, 128, 8
    $region85: #{tpu_custom_call.1} parent=1 // pred_fallthru
      _
    // Predicated region
    $region86: #{tpu_custom_call.1} parent=1 // pred_check
      _
    $region87: #{tpu_custom_call.1} parent=1 // pred_check_branch
      %215 = sbr.rel (0) target = $region89
    $region88: #{tpu_custom_call.1} parent=1 // pred_region
      _
    $region89: #{tpu_custom_call.1} parent=1 // pred_fallthru
      _
    // Predicated region
    $region90: #{tpu_custom_call.1} parent=1 // pred_check
      _
    $region91: #{tpu_custom_call.1} parent=1 // pred_check_branch
      %217 = sbr.rel (0) target = $region93
    $region92: #{tpu_custom_call.1} parent=1 // pred_region
      %219 = vsyncadd [#allocation21], 0
      %s220 = sshll.u32 %s22, 4
      %s221 = int_to_ptr.hbm [resolvable:$true] %s220
      %s222 = sshll.u32 [#allocation22], 4
      %s223 = int_to_ptr.vmem [resolvable:$true] %s222
      %228 = dma.hbm_to_vmem [thread:$0]  %s221, 2048, %s223, [#allocation21], 128, 128, 8
    $region93: #{tpu_custom_call.1} parent=1 // pred_fallthru
      _
    // Predicated region
    $region94: #{tpu_custom_call.1} parent=1 // pred_check
      _
    $region95: #{tpu_custom_call.1} parent=1 // pred_check_branch
      %230 = sbr.rel (0) target = $region97
    $region96: #{tpu_custom_call.1} parent=1 // pred_region
      _
    $region97: #{tpu_custom_call.1} parent=1 // pred_fallthru
      _
    // Predicated region
    $region98: #{tpu_custom_call.1} parent=1 // pred_check
      _
    $region99: #{tpu_custom_call.1} parent=1 // pred_check_branch
      %232 = sbr.rel (0) target = $region101
    $region100: #{tpu_custom_call.1} parent=1 // pred_region
      %234 = dma.done [#allocation3], 128
    $region101: #{tpu_custom_call.1} parent=1 // pred_fallthru
      _
    // Predicated region
    $region102: #{tpu_custom_call.1} parent=1 // pred_check
      _
    $region103: #{tpu_custom_call.1} parent=1 // pred_check_branch
      %236 = sbr.rel (0) target = $region105
    $region104: #{tpu_custom_call.1} parent=1 // pred_region
      %238 = dma.done [#allocation6], 128
    $region105: #{tpu_custom_call.1} parent=1 // pred_fallthru
      _
    // Predicated region
    $region106: #{tpu_custom_call.1} parent=1 // pred_check
      _
    $region107: #{tpu_custom_call.1} parent=1 // pred_check_branch
      %240 = sbr.rel (0) target = $region109
    $region108: #{tpu_custom_call.1} parent=1 // pred_region
      %242 = dma.done [#allocation6], 2048
    $region109: #{tpu_custom_call.1} parent=1 // pred_fallthru
      _
    // Predicated region
    $region110: #{tpu_custom_call.1} parent=1 // pred_check
      _
    $region111: #{tpu_custom_call.1} parent=1 // pred_check_branch
      %244 = sbr.rel (0) target = $region113
    $region112: #{tpu_custom_call.1} parent=1 // pred_region
      %246 = dma.done [#allocation9], 2048
    $region113: #{tpu_custom_call.1} parent=1 // pred_fallthru
      _
    // Predicated region
    $region114: #{tpu_custom_call.1} parent=1 // pred_check
      _
    $region115: #{tpu_custom_call.1} parent=1 // pred_check_branch
      %248 = sbr.rel (0) target = $region117
    $region116: #{tpu_custom_call.1} parent=1 // pred_region
      %250 = dma.done [#allocation9], 2048
    $region117: #{tpu_custom_call.1} parent=1 // pred_fallthru
      _
    // Predicated region
    $region118: #{tpu_custom_call.1} parent=1 // pred_check
      _
    $region119: #{tpu_custom_call.1} parent=1 // pred_check_branch
      %252 = sbr.rel (0) target = $region121
    $region120: #{tpu_custom_call.1} parent=1 // pred_region
      %254 = dma.done [#allocation12], 2048
    $region121: #{tpu_custom_call.1} parent=1 // pred_fallthru
      _
    // Predicated region
    $region122: #{tpu_custom_call.1} parent=1 // pred_check
      _
    $region123: #{tpu_custom_call.1} parent=1 // pred_check_branch
      %256 = sbr.rel (0) target = $region125
    $region124: #{tpu_custom_call.1} parent=1 // pred_region
      %258 = dma.done [#allocation12], 2048
    $region125: #{tpu_custom_call.1} parent=1 // pred_fallthru
      _
    // Predicated region
    $region126: #{tpu_custom_call.1} parent=1 // pred_check
      _
    $region127: #{tpu_custom_call.1} parent=1 // pred_check_branch
      %260 = sbr.rel (0) target = $region129
    $region128: #{tpu_custom_call.1} parent=1 // pred_region
      %262 = dma.done [#allocation15], 2048
    $region129: #{tpu_custom_call.1} parent=1 // pred_fallthru
      _
    // Predicated region
    $region130: #{tpu_custom_call.1} parent=1 // pred_check
      _
    $region131: #{tpu_custom_call.1} parent=1 // pred_check_branch
      %264 = sbr.rel (0) target = $region133
    $region132: #{tpu_custom_call.1} parent=1 // pred_region
      %266 = dma.done [#allocation15], 2048
    $region133: #{tpu_custom_call.1} parent=1 // pred_fallthru
      _
    // Predicated region
    $region134: #{tpu_custom_call.1} parent=1 // pred_check
      _
    $region135: #{tpu_custom_call.1} parent=1 // pred_check_branch
      %268 = sbr.rel (0) target = $region137
    $region136: #{tpu_custom_call.1} parent=1 // pred_region
      %270 = dma.done [#allocation18], 2048
    $region137: #{tpu_custom_call.1} parent=1 // pred_fallthru
      _
    // Predicated region
    $region138: #{tpu_custom_call.1} parent=1 // pred_check
      _
    $region139: #{tpu_custom_call.1} parent=1 // pred_check_branch
      %272 = sbr.rel (0) target = $region141
    $region140: #{tpu_custom_call.1} parent=1 // pred_region
      %274 = dma.done [#allocation18], 2048
    $region141: #{tpu_custom_call.1} parent=1 // pred_fallthru
      _
    // Predicated region
    $region142: #{tpu_custom_call.1} parent=1 // pred_check
      _
    $region143: #{tpu_custom_call.1} parent=1 // pred_check_branch
      %276 = sbr.rel (0) target = $region145
    $region144: #{tpu_custom_call.1} parent=1 // pred_region
      %278 = dma.done [#allocation21], 2048
    $region145: #{tpu_custom_call.1} parent=1 // pred_fallthru
      _
    // Predicated region
    $region146: #{tpu_custom_call.1} parent=1 // pred_check
      _
    $region147: #{tpu_custom_call.1} parent=1 // pred_check_branch
      %280 = sbr.rel (0) target = $region149
    $region148: #{tpu_custom_call.1} parent=1 // pred_region
      %282 = dma.done [#allocation21], 2048
    $region149: #{tpu_custom_call.1} parent=1 // pred_fallthru
      _
    %v283 = vld [vmem:[#allocation2] sm:$0xff]
    %v284 = vld [vmem:[#allocation7] sm:$0xff]
    %v285 = vld [vmem:[#allocation7 + $0x8] sm:$0xff]
    %v286 = vld [vmem:[#allocation7 + $0x10] sm:$0xff]
    %v287 = vld [vmem:[#allocation7 + $0x18] sm:$0xff]
    %v288 = vld [vmem:[#allocation7 + $0x20] sm:$0xff]
    %v289 = vld [vmem:[#allocation7 + $0x28] sm:$0xff]
    %v290 = vld [vmem:[#allocation7 + $0x30] sm:$0xff]
    %v291 = vld [vmem:[#allocation7 + $0x38] sm:$0xff]
    %v292 = vld [vmem:[#allocation7 + $0x40] sm:$0xff]
    %v293 = vld [vmem:[#allocation7 + $0x48] sm:$0xff]
    %v294 = vld [vmem:[#allocation7 + $0x50] sm:$0xff]
    %v295 = vld [vmem:[#allocation7 + $0x58] sm:$0xff]
    %v296 = vld [vmem:[#allocation7 + $0x60] sm:$0xff]
    %v297 = vld [vmem:[#allocation7 + $0x68] sm:$0xff]
    %v298 = vld [vmem:[#allocation7 + $0x70] sm:$0xff]
    %v299 = vld [vmem:[#allocation7 + $0x78] sm:$0xff]
    %v300 = vld [vmem:[%s3] sm:$0x1]
    %v302 = vperm.slane %v300, 0
    %304 = vmatpush.msra.mxu0 %v299
    %305 = vmatpush.msra.mxu0 %v298
    %306 = vmatpush.msra.mxu0 %v297
    %307 = vmatpush.msra.mxu0 %v296
    %308 = vmatpush.msra.mxu0 %v295
    %309 = vmatpush.msra.mxu0 %v294
    %310 = vmatpush.msra.mxu0 %v293
    %311 = vmatpush.msra.mxu0 %v292
    %312 = vmatpush.msra.mxu0 %v291
    %313 = vmatpush.msra.mxu0 %v290
    %314 = vmatpush.msra.mxu0 %v289
    %315 = vmatpush.msra.mxu0 %v288
    %316 = vmatpush.msra.mxu0 %v287
    %317 = vmatpush.msra.mxu0 %v286
    %318 = vmatpush.msra.mxu0 %v285
    %319 = vmatpush.msra.mxu0 %v284
    %320 = vmatmul.f32.gmra.mxu0 %v283
    %v321 = vpop.f32.mrf.mxu0
    %v322 = vadd.f32 %v302, %v321
    %323 = vdwg.mxu0
    %v324 = vand.u32 2147483647, %v322
    %v325 = vsub.f32 0.0, %v324
    %v326 = vmul.f32 %v325, 1.442695
    %v327 = vpow.pop %v326
    %vm328 = vcmp.ge.f32.partialorder %v322, 0.0
    %v329 = vadd.f32 %v327, 1.0
    %v330 = vrcp.pop %v329
    %v331 = vmul.f32 %v329, %v330
    %v332 = vsub.f32 1.0, %v331
    %v333 = vmul.f32 %v330, %v332
    %v334 = vadd.f32 %v330, %v333
    %vm335 = vweird.f32 %v329
    %vm336 = vweird.f32 %v330
    %vm337 = vmor %vm335, %vm336
    %v338 = vsel %vm337, %v330, %v334
    %v339 = vand.u32 2147483647, %v329
    %vm340 = vcmp.eq.f32.partialorder %v339, 8.507059e+37
    %v341 = vand.u32 %v329, 2147483648
    %v342 = vor.u32 1.1754944e-38, %v341
    %v343 = vsel %vm340, %v342, %v338
    %v344 = vmul.f32 1.0, %v343
    %v345 = vmul.f32 %v327, %v343
    %v346 = vsel %vm328, %v344, %v345
    %v347 = vmul.f32 %v322, %v346
    %v348 = vld [vmem:[#allocation8] sm:$0xff]
    %v349 = vld [vmem:[#allocation8 + $0x8] sm:$0xff]
    %v350 = vld [vmem:[#allocation8 + $0x10] sm:$0xff]
    %v351 = vld [vmem:[#allocation8 + $0x18] sm:$0xff]
    %v352 = vld [vmem:[#allocation8 + $0x20] sm:$0xff]
    %v353 = vld [vmem:[#allocation8 + $0x28] sm:$0xff]
    %v354 = vld [vmem:[#allocation8 + $0x30] sm:$0xff]
    %v355 = vld [vmem:[#allocation8 + $0x38] sm:$0xff]
    %v356 = vld [vmem:[#allocation8 + $0x40] sm:$0xff]
    %v357 = vld [vmem:[#allocation8 + $0x48] sm:$0xff]
    %v358 = vld [vmem:[#allocation8 + $0x50] sm:$0xff]
    %v359 = vld [vmem:[#allocation8 + $0x58] sm:$0xff]
    %v360 = vld [vmem:[#allocation8 + $0x60] sm:$0xff]
    %v361 = vld [vmem:[#allocation8 + $0x68] sm:$0xff]
    %v362 = vld [vmem:[#allocation8 + $0x70] sm:$0xff]
    %v363 = vld [vmem:[#allocation8 + $0x78] sm:$0xff]
    %v364 = vld [vmem:[%s5] sm:$0x1]
    %v366 = vperm.slane %v364, 0
    %368 = vmatpush.msra.mxu0 %v363
    %369 = vmatpush.msra.mxu0 %v362
    %370 = vmatpush.msra.mxu0 %v361
    %371 = vmatpush.msra.mxu0 %v360
    %372 = vmatpush.msra.mxu0 %v359
    %373 = vmatpush.msra.mxu0 %v358
    %374 = vmatpush.msra.mxu0 %v357
    %375 = vmatpush.msra.mxu0 %v356
    %376 = vmatpush.msra.mxu0 %v355
    %377 = vmatpush.msra.mxu0 %v354
    %378 = vmatpush.msra.mxu0 %v353
    %379 = vmatpush.msra.mxu0 %v352
    %380 = vmatpush.msra.mxu0 %v351
    %381 = vmatpush.msra.mxu0 %v350
    %382 = vmatpush.msra.mxu0 %v349
    %383 = vmatpush.msra.mxu0 %v348
    %384 = vmatmul.f32.gmra.mxu0 %v347
    %v385 = vpop.f32.mrf.mxu0
    %v386 = vadd.f32 %v366, %v385
    %387 = vdwg.mxu0
    %v388 = vand.u32 2147483647, %v386
    %v389 = vsub.f32 0.0, %v388
    %v390 = vmul.f32 %v389, 1.442695
    %v391 = vpow.pop %v390
    %vm392 = vcmp.ge.f32.partialorder %v386, 0.0
    %v393 = vadd.f32 %v391, 1.0
    %v394 = vrcp.pop %v393
    %v395 = vmul.f32 %v393, %v394
    %v396 = vsub.f32 1.0, %v395
    %v397 = vmul.f32 %v394, %v396
    %v398 = vadd.f32 %v394, %v397
    %vm399 = vweird.f32 %v393
    %vm400 = vweird.f32 %v394
    %vm401 = vmor %vm399, %vm400
    %v402 = vsel %vm401, %v394, %v398
    %v403 = vand.u32 2147483647, %v393
    %vm404 = vcmp.eq.f32.partialorder %v403, 8.507059e+37
    %v405 = vand.u32 %v393, 2147483648
    %v406 = vor.u32 1.1754944e-38, %v405
    %v407 = vsel %vm404, %v406, %v402
    %v408 = vmul.f32 1.0, %v407
    %v409 = vmul.f32 %v391, %v407
    %v410 = vsel %vm392, %v408, %v409
    %v411 = vmul.f32 %v386, %v410
    %v412 = vld [vmem:[#allocation10] sm:$0xff]
    %v413 = vld [vmem:[#allocation10 + $0x8] sm:$0xff]
    %v414 = vld [vmem:[#allocation10 + $0x10] sm:$0xff]
    %v415 = vld [vmem:[#allocation10 + $0x18] sm:$0xff]
    %v416 = vld [vmem:[#allocation10 + $0x20] sm:$0xff]
    %v417 = vld [vmem:[#allocation10 + $0x28] sm:$0xff]
    %v418 = vld [vmem:[#allocation10 + $0x30] sm:$0xff]
    %v419 = vld [vmem:[#allocation10 + $0x38] sm:$0xff]
    %v420 = vld [vmem:[#allocation10 + $0x40] sm:$0xff]
    %v421 = vld [vmem:[#allocation10 + $0x48] sm:$0xff]
    %v422 = vld [vmem:[#allocation10 + $0x50] sm:$0xff]
    %v423 = vld [vmem:[#allocation10 + $0x58] sm:$0xff]
    %v424 = vld [vmem:[#allocation10 + $0x60] sm:$0xff]
    %v425 = vld [vmem:[#allocation10 + $0x68] sm:$0xff]
    %v426 = vld [vmem:[#allocation10 + $0x70] sm:$0xff]
    %v427 = vld [vmem:[#allocation10 + $0x78] sm:$0xff]
    %v428 = vld [vmem:[%s7] sm:$0x1]
    %v430 = vperm.slane %v428, 0
    %432 = vmatpush.msra.mxu0 %v427
    %433 = vmatpush.msra.mxu0 %v426
    %434 = vmatpush.msra.mxu0 %v425
    %435 = vmatpush.msra.mxu0 %v424
    %436 = vmatpush.msra.mxu0 %v423
    %437 = vmatpush.msra.mxu0 %v422
    %438 = vmatpush.msra.mxu0 %v421
    %439 = vmatpush.msra.mxu0 %v420
    %440 = vmatpush.msra.mxu0 %v419
    %441 = vmatpush.msra.mxu0 %v418
    %442 = vmatpush.msra.mxu0 %v417
    %443 = vmatpush.msra.mxu0 %v416
    %444 = vmatpush.msra.mxu0 %v415
    %445 = vmatpush.msra.mxu0 %v414
    %446 = vmatpush.msra.mxu0 %v413
    %447 = vmatpush.msra.mxu0 %v412
    %448 = vmatmul.f32.gmra.mxu0 %v411
    %v449 = vpop.f32.mrf.mxu0
    %v450 = vadd.f32 %v430, %v449
    %451 = vdwg.mxu0
    %v452 = vand.u32 2147483647, %v450
    %v453 = vsub.f32 0.0, %v452
    %v454 = vmul.f32 %v453, 1.442695
    %v455 = vpow.pop %v454
    %vm456 = vcmp.ge.f32.partialorder %v450, 0.0
    %v457 = vadd.f32 %v455, 1.0
    %v458 = vrcp.pop %v457
    %v459 = vmul.f32 %v457, %v458
    %v460 = vsub.f32 1.0, %v459
    %v461 = vmul.f32 %v458, %v460
    %v462 = vadd.f32 %v458, %v461
    %vm463 = vweird.f32 %v457
    %vm464 = vweird.f32 %v458
    %vm465 = vmor %vm463, %vm464
    %v466 = vsel %vm465, %v458, %v462
    %v467 = vand.u32 2147483647, %v457
    %vm468 = vcmp.eq.f32.partialorder %v467, 8.507059e+37
    %v469 = vand.u32 %v457, 2147483648
    %v470 = vor.u32 1.1754944e-38, %v469
    %v471 = vsel %vm468, %v470, %v466
    %v472 = vmul.f32 1.0, %v471
    %v473 = vmul.f32 %v455, %v471
    %v474 = vsel %vm456, %v472, %v473
    %v475 = vmul.f32 %v450, %v474
    %v476 = vld [vmem:[#allocation11] sm:$0xff]
    %v477 = vld [vmem:[#allocation11 + $0x8] sm:$0xff]
    %v478 = vld [vmem:[#allocation11 + $0x10] sm:$0xff]
    %v479 = vld [vmem:[#allocation11 + $0x18] sm:$0xff]
    %v480 = vld [vmem:[#allocation11 + $0x20] sm:$0xff]
    %v481 = vld [vmem:[#allocation11 + $0x28] sm:$0xff]
    %v482 = vld [vmem:[#allocation11 + $0x30] sm:$0xff]
    %v483 = vld [vmem:[#allocation11 + $0x38] sm:$0xff]
    %v484 = vld [vmem:[#allocation11 + $0x40] sm:$0xff]
    %v485 = vld [vmem:[#allocation11 + $0x48] sm:$0xff]
    %v486 = vld [vmem:[#allocation11 + $0x50] sm:$0xff]
    %v487 = vld [vmem:[#allocation11 + $0x58] sm:$0xff]
    %v488 = vld [vmem:[#allocation11 + $0x60] sm:$0xff]
    %v489 = vld [vmem:[#allocation11 + $0x68] sm:$0xff]
    %v490 = vld [vmem:[#allocation11 + $0x70] sm:$0xff]
    %v491 = vld [vmem:[#allocation11 + $0x78] sm:$0xff]
    %v492 = vld [vmem:[%s9] sm:$0x1]
    %v494 = vperm.slane %v492, 0
    %496 = vmatpush.msra.mxu0 %v491
    %497 = vmatpush.msra.mxu0 %v490
    %498 = vmatpush.msra.mxu0 %v489
    %499 = vmatpush.msra.mxu0 %v488
    %500 = vmatpush.msra.mxu0 %v487
    %501 = vmatpush.msra.mxu0 %v486
    %502 = vmatpush.msra.mxu0 %v485
    %503 = vmatpush.msra.mxu0 %v484
    %504 = vmatpush.msra.mxu0 %v483
    %505 = vmatpush.msra.mxu0 %v482
    %506 = vmatpush.msra.mxu0 %v481
    %507 = vmatpush.msra.mxu0 %v480
    %508 = vmatpush.msra.mxu0 %v479
    %509 = vmatpush.msra.mxu0 %v478
    %510 = vmatpush.msra.mxu0 %v477
    %511 = vmatpush.msra.mxu0 %v476
    %512 = vmatmul.f32.gmra.mxu0 %v475
    %v513 = vpop.f32.mrf.mxu0
    %v514 = vadd.f32 %v494, %v513
    %515 = vdwg.mxu0
    %v516 = vand.u32 2147483647, %v514
    %v517 = vsub.f32 0.0, %v516
    %v518 = vmul.f32 %v517, 1.442695
    %v519 = vpow.pop %v518
    %vm520 = vcmp.ge.f32.partialorder %v514, 0.0
    %v521 = vadd.f32 %v519, 1.0
    %v522 = vrcp.pop %v521
    %v523 = vmul.f32 %v521, %v522
    %v524 = vsub.f32 1.0, %v523
    %v525 = vmul.f32 %v522, %v524
    %v526 = vadd.f32 %v522, %v525
    %vm527 = vweird.f32 %v521
    %vm528 = vweird.f32 %v522
    %vm529 = vmor %vm527, %vm528
    %v530 = vsel %vm529, %v522, %v526
    %v531 = vand.u32 2147483647, %v521
    %vm532 = vcmp.eq.f32.partialorder %v531, 8.507059e+37
    %v533 = vand.u32 %v521, 2147483648
    %v534 = vor.u32 1.1754944e-38, %v533
    %v535 = vsel %vm532, %v534, %v530
    %v536 = vmul.f32 1.0, %v535
    %v537 = vmul.f32 %v519, %v535
    %v538 = vsel %vm520, %v536, %v537
    %v539 = vmul.f32 %v514, %v538
    %v540 = vld [vmem:[#allocation13] sm:$0xff]
    %v541 = vld [vmem:[#allocation13 + $0x8] sm:$0xff]
    %v542 = vld [vmem:[#allocation13 + $0x10] sm:$0xff]
    %v543 = vld [vmem:[#allocation13 + $0x18] sm:$0xff]
    %v544 = vld [vmem:[#allocation13 + $0x20] sm:$0xff]
    %v545 = vld [vmem:[#allocation13 + $0x28] sm:$0xff]
    %v546 = vld [vmem:[#allocation13 + $0x30] sm:$0xff]
    %v547 = vld [vmem:[#allocation13 + $0x38] sm:$0xff]
    %v548 = vld [vmem:[#allocation13 + $0x40] sm:$0xff]
    %v549 = vld [vmem:[#allocation13 + $0x48] sm:$0xff]
    %v550 = vld [vmem:[#allocation13 + $0x50] sm:$0xff]
    %v551 = vld [vmem:[#allocation13 + $0x58] sm:$0xff]
    %v552 = vld [vmem:[#allocation13 + $0x60] sm:$0xff]
    %v553 = vld [vmem:[#allocation13 + $0x68] sm:$0xff]
    %v554 = vld [vmem:[#allocation13 + $0x70] sm:$0xff]
    %v555 = vld [vmem:[#allocation13 + $0x78] sm:$0xff]
    %v556 = vld [vmem:[%s11] sm:$0x1]
    %v558 = vperm.slane %v556, 0
    %560 = vmatpush.msra.mxu0 %v555
    %561 = vmatpush.msra.mxu0 %v554
    %562 = vmatpush.msra.mxu0 %v553
    %563 = vmatpush.msra.mxu0 %v552
    %564 = vmatpush.msra.mxu0 %v551
    %565 = vmatpush.msra.mxu0 %v550
    %566 = vmatpush.msra.mxu0 %v549
    %567 = vmatpush.msra.mxu0 %v548
    %568 = vmatpush.msra.mxu0 %v547
    %569 = vmatpush.msra.mxu0 %v546
    %570 = vmatpush.msra.mxu0 %v545
    %571 = vmatpush.msra.mxu0 %v544
    %572 = vmatpush.msra.mxu0 %v543
    %573 = vmatpush.msra.mxu0 %v542
    %574 = vmatpush.msra.mxu0 %v541
    %575 = vmatpush.msra.mxu0 %v540
    %576 = vmatmul.f32.gmra.mxu0 %v539
    %v577 = vpop.f32.mrf.mxu0
    %v578 = vadd.f32 %v558, %v577
    %579 = vdwg.mxu0
    %v580 = vld [vmem:[#allocation14] sm:$0xff]
    %v581 = vld [vmem:[#allocation14 + $0x8] sm:$0xff]
    %v582 = vld [vmem:[#allocation14 + $0x10] sm:$0xff]
    %v583 = vld [vmem:[#allocation14 + $0x18] sm:$0xff]
    %v584 = vld [vmem:[#allocation14 + $0x20] sm:$0xff]
    %v585 = vld [vmem:[#allocation14 + $0x28] sm:$0xff]
    %v586 = vld [vmem:[#allocation14 + $0x30] sm:$0xff]
    %v587 = vld [vmem:[#allocation14 + $0x38] sm:$0xff]
    %v588 = vld [vmem:[#allocation14 + $0x40] sm:$0xff]
    %v589 = vld [vmem:[#allocation14 + $0x48] sm:$0xff]
    %v590 = vld [vmem:[#allocation14 + $0x50] sm:$0xff]
    %v591 = vld [vmem:[#allocation14 + $0x58] sm:$0xff]
    %v592 = vld [vmem:[#allocation14 + $0x60] sm:$0xff]
    %v593 = vld [vmem:[#allocation14 + $0x68] sm:$0xff]
    %v594 = vld [vmem:[#allocation14 + $0x70] sm:$0xff]
    %v595 = vld [vmem:[#allocation14 + $0x78] sm:$0xff]
    %v596 = vld [vmem:[%s13] sm:$0x1]
    %v598 = vperm.slane %v596, 0
    %600 = vmatpush.msra.mxu0 %v595
    %601 = vmatpush.msra.mxu0 %v594
    %602 = vmatpush.msra.mxu0 %v593
    %603 = vmatpush.msra.mxu0 %v592
    %604 = vmatpush.msra.mxu0 %v591
    %605 = vmatpush.msra.mxu0 %v590
    %606 = vmatpush.msra.mxu0 %v589
    %607 = vmatpush.msra.mxu0 %v588
    %608 = vmatpush.msra.mxu0 %v587
    %609 = vmatpush.msra.mxu0 %v586
    %610 = vmatpush.msra.mxu0 %v585
    %611 = vmatpush.msra.mxu0 %v584
    %612 = vmatpush.msra.mxu0 %v583
    %613 = vmatpush.msra.mxu0 %v582
    %614 = vmatpush.msra.mxu0 %v581
    %615 = vmatpush.msra.mxu0 %v580
    %616 = vmatmul.f32.gmra.mxu0 %v539
    %v617 = vpop.f32.mrf.mxu0
    %v618 = vadd.f32 %v598, %v617
    %619 = vdwg.mxu0
    %vm620 = vcmp.gt.f32.partialorder %v618, 20.0
    %v621 = vmin.f32 %v618, 20.0
    %v622 = vmul.f32 %v621, 1.442695
    %v623 = vpow.pop %v622
    %v624 = vadd.f32 %v623, 1.0
    %v625 = vlog2.pop %v624
    %v626 = vmul.f32 %v625, 0.6931472
    %v627 = vmul.f32 -0.5, %v623
    %v628 = vadd.f32 %v627, 1.0
    %v629 = vmul.f32 %v628, %v623
    %v630 = vand.u32 2147483647, %v623
    %vm631 = vcmp.lt.f32.partialorder %v630, 0.0004427343
    %v632 = vsel %vm631, %v629, %v626
    %v633 = vsel %vm620, %v618, %v632
    %v634 = vadd.f32 %v633, 1e-08
    %v635 = vld [vmem:[#allocation5] sm:$0xff]
    %v636 = vmul.f32 %v634, %v635
    %v637 = vadd.f32 %v578, %v636
    %v638 = vld [vmem:[#allocation16] sm:$0xff]
    %v639 = vld [vmem:[#allocation16 + $0x8] sm:$0xff]
    %v640 = vld [vmem:[#allocation16 + $0x10] sm:$0xff]
    %v641 = vld [vmem:[#allocation16 + $0x18] sm:$0xff]
    %v642 = vld [vmem:[#allocation16 + $0x20] sm:$0xff]
    %v643 = vld [vmem:[#allocation16 + $0x28] sm:$0xff]
    %v644 = vld [vmem:[#allocation16 + $0x30] sm:$0xff]
    %v645 = vld [vmem:[#allocation16 + $0x38] sm:$0xff]
    %v646 = vld [vmem:[#allocation16 + $0x40] sm:$0xff]
    %v647 = vld [vmem:[#allocation16 + $0x48] sm:$0xff]
    %v648 = vld [vmem:[#allocation16 + $0x50] sm:$0xff]
    %v649 = vld [vmem:[#allocation16 + $0x58] sm:$0xff]
    %v650 = vld [vmem:[#allocation16 + $0x60] sm:$0xff]
    %v651 = vld [vmem:[#allocation16 + $0x68] sm:$0xff]
    %v652 = vld [vmem:[#allocation16 + $0x70] sm:$0xff]
    %v653 = vld [vmem:[#allocation16 + $0x78] sm:$0xff]
    %v654 = vld [vmem:[%s15] sm:$0x1]
    %v656 = vperm.slane %v654, 0
    %658 = vmatpush.msra.mxu0 %v653
    %659 = vmatpush.msra.mxu0 %v652
    %660 = vmatpush.msra.mxu0 %v651
    %661 = vmatpush.msra.mxu0 %v650
    %662 = vmatpush.msra.mxu0 %v649
    %663 = vmatpush.msra.mxu0 %v648
    %664 = vmatpush.msra.mxu0 %v647
    %665 = vmatpush.msra.mxu0 %v646
    %666 = vmatpush.msra.mxu0 %v645
    %667 = vmatpush.msra.mxu0 %v644
    %668 = vmatpush.msra.mxu0 %v643
    %669 = vmatpush.msra.mxu0 %v642
    %670 = vmatpush.msra.mxu0 %v641
    %671 = vmatpush.msra.mxu0 %v640
    %672 = vmatpush.msra.mxu0 %v639
    %673 = vmatpush.msra.mxu0 %v638
    %674 = vmatmul.f32.gmra.mxu0 %v637
    %v675 = vpop.f32.mrf.mxu0
    %v676 = vadd.f32 %v656, %v675
    %677 = vdwg.mxu0
    %v678 = vand.u32 2147483647, %v676
    %v679 = vsub.f32 0.0, %v678
    %v680 = vmul.f32 %v679, 1.442695
    %v681 = vpow.pop %v680
    %vm682 = vcmp.ge.f32.partialorder %v676, 0.0
    %v683 = vadd.f32 %v681, 1.0
    %v684 = vrcp.pop %v683
    %v685 = vmul.f32 %v683, %v684
    %v686 = vsub.f32 1.0, %v685
    %v687 = vmul.f32 %v684, %v686
    %v688 = vadd.f32 %v684, %v687
    %vm689 = vweird.f32 %v683
    %vm690 = vweird.f32 %v684
    %vm691 = vmor %vm689, %vm690
    %v692 = vsel %vm691, %v684, %v688
    %v693 = vand.u32 2147483647, %v683
    %vm694 = vcmp.eq.f32.partialorder %v693, 8.507059e+37
    %v695 = vand.u32 %v683, 2147483648
    %v696 = vor.u32 1.1754944e-38, %v695
    %v697 = vsel %vm694, %v696, %v692
    %v698 = vmul.f32 1.0, %v697
    %v699 = vmul.f32 %v681, %v697
    %v700 = vsel %vm682, %v698, %v699
    %v701 = vmul.f32 %v676, %v700
    %v702 = vld [vmem:[#allocation17] sm:$0xff]
    %v703 = vld [vmem:[#allocation17 + $0x8] sm:$0xff]
    %v704 = vld [vmem:[#allocation17 + $0x10] sm:$0xff]
    %v705 = vld [vmem:[#allocation17 + $0x18] sm:$0xff]
    %v706 = vld [vmem:[#allocation17 + $0x20] sm:$0xff]
    %v707 = vld [vmem:[#allocation17 + $0x28] sm:$0xff]
    %v708 = vld [vmem:[#allocation17 + $0x30] sm:$0xff]
    %v709 = vld [vmem:[#allocation17 + $0x38] sm:$0xff]
    %v710 = vld [vmem:[#allocation17 + $0x40] sm:$0xff]
    %v711 = vld [vmem:[#allocation17 + $0x48] sm:$0xff]
    %v712 = vld [vmem:[#allocation17 + $0x50] sm:$0xff]
    %v713 = vld [vmem:[#allocation17 + $0x58] sm:$0xff]
    %v714 = vld [vmem:[#allocation17 + $0x60] sm:$0xff]
    %v715 = vld [vmem:[#allocation17 + $0x68] sm:$0xff]
    %v716 = vld [vmem:[#allocation17 + $0x70] sm:$0xff]
    %v717 = vld [vmem:[#allocation17 + $0x78] sm:$0xff]
    %v718 = vld [vmem:[%s17] sm:$0x1]
    %v720 = vperm.slane %v718, 0
    %722 = vmatpush.msra.mxu0 %v717
    %723 = vmatpush.msra.mxu0 %v716
    %724 = vmatpush.msra.mxu0 %v715
    %725 = vmatpush.msra.mxu0 %v714
    %726 = vmatpush.msra.mxu0 %v713
    %727 = vmatpush.msra.mxu0 %v712
    %728 = vmatpush.msra.mxu0 %v711
    %729 = vmatpush.msra.mxu0 %v710
    %730 = vmatpush.msra.mxu0 %v709
    %731 = vmatpush.msra.mxu0 %v708
    %732 = vmatpush.msra.mxu0 %v707
    %733 = vmatpush.msra.mxu0 %v706
    %734 = vmatpush.msra.mxu0 %v705
    %735 = vmatpush.msra.mxu0 %v704
    %736 = vmatpush.msra.mxu0 %v703
    %737 = vmatpush.msra.mxu0 %v702
    %738 = vmatmul.f32.gmra.mxu0 %v701
    %v739 = vpop.f32.mrf.mxu0
    %v740 = vadd.f32 %v720, %v739
    %741 = vdwg.mxu0
    %v742 = vand.u32 2147483647, %v740
    %v743 = vsub.f32 0.0, %v742
    %v744 = vmul.f32 %v743, 1.442695
    %v745 = vpow.pop %v744
    %vm746 = vcmp.ge.f32.partialorder %v740, 0.0
    %v747 = vadd.f32 %v745, 1.0
    %v748 = vrcp.pop %v747
    %v749 = vmul.f32 %v747, %v748
    %v750 = vsub.f32 1.0, %v749
    %v751 = vmul.f32 %v748, %v750
    %v752 = vadd.f32 %v748, %v751
    %vm753 = vweird.f32 %v747
    %vm754 = vweird.f32 %v748
    %vm755 = vmor %vm753, %vm754
    %v756 = vsel %vm755, %v748, %v752
    %v757 = vand.u32 2147483647, %v747
    %vm758 = vcmp.eq.f32.partialorder %v757, 8.507059e+37
    %v759 = vand.u32 %v747, 2147483648
    %v760 = vor.u32 1.1754944e-38, %v759
    %v761 = vsel %vm758, %v760, %v756
    %v762 = vmul.f32 1.0, %v761
    %v763 = vmul.f32 %v745, %v761
    %v764 = vsel %vm746, %v762, %v763
    %v765 = vmul.f32 %v740, %v764
    %v766 = vld [vmem:[#allocation19] sm:$0xff]
    %v767 = vld [vmem:[#allocation19 + $0x8] sm:$0xff]
    %v768 = vld [vmem:[#allocation19 + $0x10] sm:$0xff]
    %v769 = vld [vmem:[#allocation19 + $0x18] sm:$0xff]
    %v770 = vld [vmem:[#allocation19 + $0x20] sm:$0xff]
    %v771 = vld [vmem:[#allocation19 + $0x28] sm:$0xff]
    %v772 = vld [vmem:[#allocation19 + $0x30] sm:$0xff]
    %v773 = vld [vmem:[#allocation19 + $0x38] sm:$0xff]
    %v774 = vld [vmem:[#allocation19 + $0x40] sm:$0xff]
    %v775 = vld [vmem:[#allocation19 + $0x48] sm:$0xff]
    %v776 = vld [vmem:[#allocation19 + $0x50] sm:$0xff]
    %v777 = vld [vmem:[#allocation19 + $0x58] sm:$0xff]
    %v778 = vld [vmem:[#allocation19 + $0x60] sm:$0xff]
    %v779 = vld [vmem:[#allocation19 + $0x68] sm:$0xff]
    %v780 = vld [vmem:[#allocation19 + $0x70] sm:$0xff]
    %v781 = vld [vmem:[#allocation19 + $0x78] sm:$0xff]
    %v782 = vld [vmem:[%s19] sm:$0x1]
    %v784 = vperm.slane %v782, 0
    %786 = vmatpush.msra.mxu0 %v781
    %787 = vmatpush.msra.mxu0 %v780
    %788 = vmatpush.msra.mxu0 %v779
    %789 = vmatpush.msra.mxu0 %v778
    %790 = vmatpush.msra.mxu0 %v777
    %791 = vmatpush.msra.mxu0 %v776
    %792 = vmatpush.msra.mxu0 %v775
    %793 = vmatpush.msra.mxu0 %v774
    %794 = vmatpush.msra.mxu0 %v773
    %795 = vmatpush.msra.mxu0 %v772
    %796 = vmatpush.msra.mxu0 %v771
    %797 = vmatpush.msra.mxu0 %v770
    %798 = vmatpush.msra.mxu0 %v769
    %799 = vmatpush.msra.mxu0 %v768
    %800 = vmatpush.msra.mxu0 %v767
    %801 = vmatpush.msra.mxu0 %v766
    %802 = vmatmul.f32.gmra.mxu0 %v765
    %v803 = vpop.f32.mrf.mxu0
    %v804 = vadd.f32 %v784, %v803
    %805 = vdwg.mxu0
    %v806 = vand.u32 2147483647, %v804
    %v807 = vsub.f32 0.0, %v806
    %v808 = vmul.f32 %v807, 1.442695
    %v809 = vpow.pop %v808
    %vm810 = vcmp.ge.f32.partialorder %v804, 0.0
    %v811 = vadd.f32 %v809, 1.0
    %v812 = vrcp.pop %v811
    %v813 = vmul.f32 %v811, %v812
    %v814 = vsub.f32 1.0, %v813
    %v815 = vmul.f32 %v812, %v814
    %v816 = vadd.f32 %v812, %v815
    %vm817 = vweird.f32 %v811
    %vm818 = vweird.f32 %v812
    %vm819 = vmor %vm817, %vm818
    %v820 = vsel %vm819, %v812, %v816
    %v821 = vand.u32 2147483647, %v811
    %vm822 = vcmp.eq.f32.partialorder %v821, 8.507059e+37
    %v823 = vand.u32 %v811, 2147483648
    %v824 = vor.u32 1.1754944e-38, %v823
    %v825 = vsel %vm822, %v824, %v820
    %v826 = vmul.f32 1.0, %v825
    %v827 = vmul.f32 %v809, %v825
    %v828 = vsel %vm810, %v826, %v827
    %v829 = vmul.f32 %v804, %v828
    %v830 = vld [vmem:[#allocation20] sm:$0xff]
    %v831 = vld [vmem:[#allocation20 + $0x8] sm:$0xff]
    %v832 = vld [vmem:[#allocation20 + $0x10] sm:$0xff]
    %v833 = vld [vmem:[#allocation20 + $0x18] sm:$0xff]
    %v834 = vld [vmem:[#allocation20 + $0x20] sm:$0xff]
    %v835 = vld [vmem:[#allocation20 + $0x28] sm:$0xff]
    %v836 = vld [vmem:[#allocation20 + $0x30] sm:$0xff]
    %v837 = vld [vmem:[#allocation20 + $0x38] sm:$0xff]
    %v838 = vld [vmem:[#allocation20 + $0x40] sm:$0xff]
    %v839 = vld [vmem:[#allocation20 + $0x48] sm:$0xff]
    %v840 = vld [vmem:[#allocation20 + $0x50] sm:$0xff]
    %v841 = vld [vmem:[#allocation20 + $0x58] sm:$0xff]
    %v842 = vld [vmem:[#allocation20 + $0x60] sm:$0xff]
    %v843 = vld [vmem:[#allocation20 + $0x68] sm:$0xff]
    %v844 = vld [vmem:[#allocation20 + $0x70] sm:$0xff]
    %v845 = vld [vmem:[#allocation20 + $0x78] sm:$0xff]
    %v846 = vld [vmem:[%s21] sm:$0x1]
    %v848 = vperm.slane %v846, 0
    %850 = vmatpush.msra.mxu0 %v845
    %851 = vmatpush.msra.mxu0 %v844
    %852 = vmatpush.msra.mxu0 %v843
    %853 = vmatpush.msra.mxu0 %v842
    %854 = vmatpush.msra.mxu0 %v841
    %855 = vmatpush.msra.mxu0 %v840
    %856 = vmatpush.msra.mxu0 %v839
    %857 = vmatpush.msra.mxu0 %v838
    %858 = vmatpush.msra.mxu0 %v837
    %859 = vmatpush.msra.mxu0 %v836
    %860 = vmatpush.msra.mxu0 %v835
    %861 = vmatpush.msra.mxu0 %v834
    %862 = vmatpush.msra.mxu0 %v833
    %863 = vmatpush.msra.mxu0 %v832
    %864 = vmatpush.msra.mxu0 %v831
    %865 = vmatpush.msra.mxu0 %v830
    %866 = vmatmul.f32.gmra.mxu0 %v829
    %v867 = vpop.f32.mrf.mxu0
    %v868 = vadd.f32 %v848, %v867
    %869 = vdwg.mxu0
    %v870 = vand.u32 2147483647, %v868
    %v871 = vsub.f32 0.0, %v870
    %v872 = vmul.f32 %v871, 1.442695
    %v873 = vpow.pop %v872
    %vm874 = vcmp.ge.f32.partialorder %v868, 0.0
    %v875 = vadd.f32 %v873, 1.0
    %v876 = vrcp.pop %v875
    %v877 = vmul.f32 %v875, %v876
    %v878 = vsub.f32 1.0, %v877
    %v879 = vmul.f32 %v876, %v878
    %v880 = vadd.f32 %v876, %v879
    %vm881 = vweird.f32 %v875
    %vm882 = vweird.f32 %v876
    %vm883 = vmor %vm881, %vm882
    %v884 = vsel %vm883, %v876, %v880
    %v885 = vand.u32 2147483647, %v875
    %vm886 = vcmp.eq.f32.partialorder %v885, 8.507059e+37
    %v887 = vand.u32 %v875, 2147483648
    %v888 = vor.u32 1.1754944e-38, %v887
    %v889 = vsel %vm886, %v888, %v884
    %v890 = vmul.f32 1.0, %v889
    %v891 = vmul.f32 %v873, %v889
    %v892 = vsel %vm874, %v890, %v891
    %v893 = vmul.f32 %v868, %v892
    %v894 = vld [vmem:[#allocation22] sm:$0xff]
    %v895 = vld [vmem:[#allocation22 + $0x8] sm:$0xff]
    %v896 = vld [vmem:[#allocation22 + $0x10] sm:$0xff]
    %v897 = vld [vmem:[#allocation22 + $0x18] sm:$0xff]
    %v898 = vld [vmem:[#allocation22 + $0x20] sm:$0xff]
    %v899 = vld [vmem:[#allocation22 + $0x28] sm:$0xff]
    %v900 = vld [vmem:[#allocation22 + $0x30] sm:$0xff]
    %v901 = vld [vmem:[#allocation22 + $0x38] sm:$0xff]
    %v902 = vld [vmem:[#allocation22 + $0x40] sm:$0xff]
    %v903 = vld [vmem:[#allocation22 + $0x48] sm:$0xff]
    %v904 = vld [vmem:[#allocation22 + $0x50] sm:$0xff]
    %v905 = vld [vmem:[#allocation22 + $0x58] sm:$0xff]
    %v906 = vld [vmem:[#allocation22 + $0x60] sm:$0xff]
    %v907 = vld [vmem:[#allocation22 + $0x68] sm:$0xff]
    %v908 = vld [vmem:[#allocation22 + $0x70] sm:$0xff]
    %v909 = vld [vmem:[#allocation22 + $0x78] sm:$0xff]
    %v910 = vld [vmem:[%s23] sm:$0x1]
    %v912 = vperm.slane %v910, 0
    %914 = vmatpush.msra.mxu0 %v909
    %915 = vmatpush.msra.mxu0 %v908
    %916 = vmatpush.msra.mxu0 %v907
    %917 = vmatpush.msra.mxu0 %v906
    %918 = vmatpush.msra.mxu0 %v905
    %919 = vmatpush.msra.mxu0 %v904
    %920 = vmatpush.msra.mxu0 %v903
    %921 = vmatpush.msra.mxu0 %v902
    %922 = vmatpush.msra.mxu0 %v901
    %923 = vmatpush.msra.mxu0 %v900
    %924 = vmatpush.msra.mxu0 %v899
    %925 = vmatpush.msra.mxu0 %v898
    %926 = vmatpush.msra.mxu0 %v897
    %927 = vmatpush.msra.mxu0 %v896
    %928 = vmatpush.msra.mxu0 %v895
    %929 = vmatpush.msra.mxu0 %v894
    %930 = vmatmul.f32.gmra.mxu0 %v893
    %v931 = vpop.f32.mrf.mxu0
    %v932 = vadd.f32 %v912, %v931
    %933 = vdwg.mxu0
    %v934 = vand.u32 2147483647, %v932
    %v935 = vsub.f32 0.0, %v934
    %v936 = vmul.f32 %v935, 1.442695
    %v937 = vpow.pop %v936
    %vm938 = vcmp.ge.f32.partialorder %v932, 0.0
    %v939 = vadd.f32 %v937, 1.0
    %v940 = vrcp.pop %v939
    %v941 = vmul.f32 %v939, %v940
    %v942 = vsub.f32 1.0, %v941
    %v943 = vmul.f32 %v940, %v942
    %v944 = vadd.f32 %v940, %v943
    %vm945 = vweird.f32 %v939
    %vm946 = vweird.f32 %v940
    %vm947 = vmor %vm945, %vm946
    %v948 = vsel %vm947, %v940, %v944
    %v949 = vand.u32 2147483647, %v939
    %vm950 = vcmp.eq.f32.partialorder %v949, 8.507059e+37
    %v951 = vand.u32 %v939, 2147483648
    %v952 = vor.u32 1.1754944e-38, %v951
    %v953 = vsel %vm950, %v952, %v948
    %v954 = vmul.f32 1.0, %v953
    %v955 = vmul.f32 %v937, %v953
    %v956 = vsel %vm938, %v954, %v955
    %957 = vst [vmem:[#allocation23] sm:$0xff] %v578
    %958 = vst [vmem:[#allocation24] sm:$0xff] %v634
    %959 = vst [vmem:[#allocation26] sm:$0xff] %v637
    %960 = vst [vmem:[#allocation27] sm:$0xff] %v956
    %s961 = smul.u32 0, 8
    %v962 = vlaneseq
    %v963 = vshrl.u32 %v962, 7
    %v964 = vstv %s961
    %v965 = vadd.s32 %v964, %v963
    %vm966 = vcmp.lt.s32.totalorder %v965, 8
    %v967 = vsel %vm966, 1, 0
    %v968 = vcvt.s32.f32 %v967
    %v969 = vlaneseq
    %v970 = vand.u32 %v969, 127
    %vm971 = vcmp.lt.s32.totalorder %v970, 8
    %v972 = vsel %vm971, 1, 0
    %v973 = vcvt.s32.f32 %v972
    %vm974 = vcmp.lt.s32.totalorder %v970, 64
    %v975 = vsel %vm974, 1, 0
    %v976 = vcvt.s32.f32 %v975
    %v977 = vmul.f32 %v634, %v634
    %v978 = vmul.f32 %v578, %v578
    %v979 = vadd.f32 %v977, %v978
    %v980 = vsub.f32 %v979, 1.0
    %v981 = vlog2.pop %v634
    %v982 = vmul.f32 %v981, 0.6931472
    %v983 = vmul.f32 %v982, 2.0
    %v984 = vsub.f32 %v980, %v983
    %v985 = vmul.f32 %v984, 0.5
    %v986 = vmul.f32 %v968, %v973
    %v987 = vmul.f32 %v985, %v986
    %988 = vadd.xlane.f32.xlu0 %v987
    %v989 = vpop.xlane.xlu0 %988
    %v990 = vrot.slane %v989, 4
    %v991 = vadd.f32 %v989, %v990
    %v992 = vrot.slane %v991, 2
    %v993 = vadd.f32 %v991, %v992
    %v994 = vrot.slane %v993, 1
    %v995 = vadd.f32 %v993, %v994
    %s996 = vtos %v995
    %v997 = vadd.f32 %v283, 0.5
    %v998 = vsub.f32 0.0, %v932
    %vm999 = vcmp.gt.f32.partialorder %v998, 20.0
    %v1000 = vmin.f32 %v998, 20.0
    %v1001 = vmul.f32 %v1000, 1.442695
    %v1002 = vpow.pop %v1001
    %v1003 = vadd.f32 %v1002, 1.0
    %v1004 = vlog2.pop %v1003
    %v1005 = vmul.f32 %v1004, 0.6931472
    %v1006 = vmul.f32 -0.5, %v1002
    %v1007 = vadd.f32 %v1006, 1.0
    %v1008 = vmul.f32 %v1007, %v1002
    %v1009 = vand.u32 2147483647, %v1002
    %vm1010 = vcmp.lt.f32.partialorder %v1009, 0.0004427343
    %v1011 = vsel %vm1010, %v1008, %v1005
    %v1012 = vsel %vm999, %v998, %v1011
    %v1013 = vsub.f32 0.0, %v1012
    %v1014 = vmax.f32 %v1013, -100.0
    %vm1015 = vcmp.gt.f32.partialorder %v932, 20.0
    %v1016 = vmin.f32 %v932, 20.0
    %v1017 = vmul.f32 %v1016, 1.442695
    %v1018 = vpow.pop %v1017
    %v1019 = vadd.f32 %v1018, 1.0
    %v1020 = vlog2.pop %v1019
    %v1021 = vmul.f32 %v1020, 0.6931472
    %v1022 = vmul.f32 -0.5, %v1018
    %v1023 = vadd.f32 %v1022, 1.0
    %v1024 = vmul.f32 %v1023, %v1018
    %v1025 = vand.u32 2147483647, %v1018
    %vm1026 = vcmp.lt.f32.partialorder %v1025, 0.0004427343
    %v1027 = vsel %vm1026, %v1024, %v1021
    %v1028 = vsel %vm1015, %v932, %v1027
    %v1029 = vsub.f32 0.0, %v1028
    %v1030 = vmax.f32 %v1029, -100.0
    %v1031 = vmul.f32 %v997, %v1014
    %v1032 = vsub.f32 1.0, %v997
    %v1033 = vmul.f32 %v1032, %v1030
    %v1034 = vadd.f32 %v1031, %v1033
    %v1035 = vsub.f32 0.0, %v1034
    %v1036 = vmul.f32 %v968, %v976
    %v1037 = vmul.f32 %v1035, %v1036
    %1038 = vadd.xlane.f32.xlu0 %v1037
    %v1039 = vpop.xlane.xlu0 %1038
    %v1040 = vrot.slane %v1039, 4
    %v1041 = vadd.f32 %v1039, %v1040
    %v1042 = vrot.slane %v1041, 2
    %v1043 = vadd.f32 %v1041, %v1042
    %v1044 = vrot.slane %v1043, 1
    %v1045 = vadd.f32 %v1043, %v1044
    %s1046 = vtos %v1045
    %vm1047 = vcmp.eq.s32.totalorder %v963, 0
    %vm1048 = vcmp.eq.s32.totalorder %v970, 0
    %vm1049 = vmand %vm1047, %vm1048
    %vm1050 = vcmp.eq.s32.totalorder %v970, 1
    %vm1051 = vmand %vm1047, %vm1050
    %v1052 = vstv %s996
    %v1053 = vsel %vm1051, %v1052, 0.0
    %v1054 = vstv %s1046
    %v1055 = vsel %vm1049, %v1054, %v1053
    %1056 = vst [vmem:[#allocation29] sm:$0xff] %v1055
    // Predicated region
    $region150: #{tpu_custom_call.1} parent=1 // pred_check
      _
    $region151: #{tpu_custom_call.1} parent=1 // pred_check_branch
      %1058 = sbr.rel (0) target = $region153
    $region152: #{tpu_custom_call.1} parent=1 // pred_region
      %1060 = vsyncadd [#allocation4], 0
      %s1062 = sshll.u32 [#allocation23], 4
      %s1063 = int_to_ptr.vmem [resolvable:$true] %s1062
      %s1064 = sshll.u32 %s24, 4
      %s1065 = int_to_ptr.hbm [resolvable:$true] %s1064
      %1067 = dma.vmem_to_hbm [thread:$0]  %s1063, 128, %s1065, [#allocation4]
    $region153: #{tpu_custom_call.1} parent=1 // pred_fallthru
      _
    // Predicated region
    $region154: #{tpu_custom_call.1} parent=1 // pred_check
      _
    $region155: #{tpu_custom_call.1} parent=1 // pred_check_branch
      %1069 = sbr.rel (0) target = $region157
    $region156: #{tpu_custom_call.1} parent=1 // pred_region
      %1071 = vsyncadd [#allocation25], 0
      %s1073 = sshll.u32 [#allocation24], 4
      %s1074 = int_to_ptr.vmem [resolvable:$true] %s1073
      %s1075 = sshll.u32 %s25, 4
      %s1076 = int_to_ptr.hbm [resolvable:$true] %s1075
      %1078 = dma.vmem_to_hbm [thread:$0]  %s1074, 128, %s1076, [#allocation25]
    $region157: #{tpu_custom_call.1} parent=1 // pred_fallthru
      _
    // Predicated region
    $region158: #{tpu_custom_call.1} parent=1 // pred_check
      _
    $region159: #{tpu_custom_call.1} parent=1 // pred_check_branch
      %1080 = sbr.rel (0) target = $region161
    $region160: #{tpu_custom_call.1} parent=1 // pred_region
      %1082 = vsyncadd [#allocation25], 0
      %s1084 = sshll.u32 [#allocation26], 4
      %s1085 = int_to_ptr.vmem [resolvable:$true] %s1084
      %s1086 = sshll.u32 %s26, 4
      %s1087 = int_to_ptr.hbm [resolvable:$true] %s1086
      %1089 = dma.vmem_to_hbm [thread:$0]  %s1085, 128, %s1087, [#allocation25]
    $region161: #{tpu_custom_call.1} parent=1 // pred_fallthru
      _
    // Predicated region
    $region162: #{tpu_custom_call.1} parent=1 // pred_check
      _
    $region163: #{tpu_custom_call.1} parent=1 // pred_check_branch
      %1091 = sbr.rel (0) target = $region165
    $region164: #{tpu_custom_call.1} parent=1 // pred_region
      %1093 = vsyncadd [#allocation28], 0
      %s1095 = sshll.u32 [#allocation27], 4
      %s1096 = int_to_ptr.vmem [resolvable:$true] %s1095
      %s1097 = sshll.u32 %s27, 4
      %s1098 = int_to_ptr.hbm [resolvable:$true] %s1097
      %1100 = dma.vmem_to_hbm [thread:$0]  %s1096, 128, %s1098, [#allocation28]
    $region165: #{tpu_custom_call.1} parent=1 // pred_fallthru
      _
    // Predicated region
    $region166: #{tpu_custom_call.1} parent=1 // pred_check
      _
    $region167: #{tpu_custom_call.1} parent=1 // pred_check_branch
      %1102 = sbr.rel (0) target = $region169
    $region168: #{tpu_custom_call.1} parent=1 // pred_region
      %1104 = vsyncadd [#allocation28], 0
      %s1106 = sshll.u32 [#allocation29], 4
      %s1107 = int_to_ptr.vmem [resolvable:$true] %s1106
      %s1108 = sshll.u32 %s28, 4
      %s1109 = int_to_ptr.hbm [resolvable:$true] %s1108
      %1111 = dma.vmem_to_hbm [thread:$0]  %s1107, 128, %s1109, [#allocation28]
    $region169: #{tpu_custom_call.1} parent=1 // pred_fallthru
      _
    // Predicated region
    $region170: #{tpu_custom_call.1} parent=1 // pred_check
      _
    $region171: #{tpu_custom_call.1} parent=1 // pred_check_branch
      %1113 = sbr.rel (0) target = $region173
    $region172: #{tpu_custom_call.1} parent=1 // pred_region
      %1115 = dma.done [#allocation4], 128
    $region173: #{tpu_custom_call.1} parent=1 // pred_fallthru
      _
    // Predicated region
    $region174: #{tpu_custom_call.1} parent=1 // pred_check
      _
    $region175: #{tpu_custom_call.1} parent=1 // pred_check_branch
      %1117 = sbr.rel (0) target = $region177
    $region176: #{tpu_custom_call.1} parent=1 // pred_region
      %1119 = dma.done [#allocation25], 128
    $region177: #{tpu_custom_call.1} parent=1 // pred_fallthru
      _
    // Predicated region
    $region178: #{tpu_custom_call.1} parent=1 // pred_check
      _
    $region179: #{tpu_custom_call.1} parent=1 // pred_check_branch
      %1121 = sbr.rel (0) target = $region181
    $region180: #{tpu_custom_call.1} parent=1 // pred_region
      %1123 = dma.done [#allocation25], 128
    $region181: #{tpu_custom_call.1} parent=1 // pred_fallthru
      _
    // Predicated region
    $region182: #{tpu_custom_call.1} parent=1 // pred_check
      _
    $region183: #{tpu_custom_call.1} parent=1 // pred_check_branch
      %1125 = sbr.rel (0) target = $region185
    $region184: #{tpu_custom_call.1} parent=1 // pred_region
      %1127 = dma.done [#allocation28], 128
    $region185: #{tpu_custom_call.1} parent=1 // pred_fallthru
      _
    // Predicated region
    $region186: #{tpu_custom_call.1} parent=1 // pred_check
      _
    $region187: #{tpu_custom_call.1} parent=1 // pred_check_branch
      %1129 = sbr.rel (0) target = $region189
    $region188: #{tpu_custom_call.1} parent=1 // pred_region
      %1131 = dma.done [#allocation28], 128
    $region189: #{tpu_custom_call.1} parent=1 // pred_fallthru
      _
    %1132 = vsyncpa [#allocation3], 1
    %1133 = vsyncpa [#allocation6], 1
    %1134 = vsyncpa [#allocation9], 1
    %1135 = vsyncpa [#allocation12], 1
    %1136 = vsyncpa [#allocation15], 1
    %1137 = vsyncpa [#allocation18], 1
    %1138 = vsyncpa [#allocation21], 1
    %1139 = vsyncpa [#allocation4], 1
    %1140 = vsyncpa [#allocation25], 1
    %1141 = vsyncpa [#allocation28], 1

</llo_original>
